<compile_context>
chip_gen: v6e
topology: v6e:2x2x1
jax: 0.10.0
libtpu: 0.0.40
codegen_flags: <defaults>
</compile_context>

<pallas_src>
import jax
import jax.numpy as jnp
import numpy as np
from jax.experimental import pallas as pl
from jax.experimental.pallas import tpu as pltpu

_EPS = 1e-5


def _bn_relu_conv_stage(x, gamma, beta, sel, expd, w0, w1, w2, bias, sd, su, n_pool):
    """BN(train) + ReLU + Conv3x3(pad=1) on one lane-packed (N*H, W*C) slab (register values)."""
    inv_n = 1.0 / n_pool

    # ---- BatchNorm2d (training mode): per-channel stats over (N, H, W) ----
    # Per-lane sums, then fold W lane-groups into per-channel totals with a selection
    # matmul (lanes -> channels); broadcast back to lanes with its transpose.
    sum_l = jnp.sum(x, axis=0, keepdims=True)                               # (1, W*Cin)
    mean_c = jnp.dot(sum_l, sel, preferred_element_type=jnp.float32) * inv_n   # (1, C)
    mean_l = jnp.dot(mean_c, expd, preferred_element_type=jnp.float32)         # (1, W*Cin)
    xc = x - mean_l
    ss_l = jnp.sum(xc * xc, axis=0, keepdims=True)
    var_c = jnp.dot(ss_l, sel, preferred_element_type=jnp.float32) * inv_n     # biased var
    a_c = gamma * jax.lax.rsqrt(var_c + _EPS)
    a_l = jnp.dot(a_c, expd, preferred_element_type=jnp.float32)
    b_l = jnp.dot(beta, expd, preferred_element_type=jnp.float32)

    # ---- BN affine + ReLU ----
    y = jnp.maximum(xc * a_l + b_l, 0.0)                                    # (N*H, W*Cin)

    # ---- Conv3x3: dx taps + W zero-padding live in w_dy (block-banded, lane-packed);
    #      dy taps + H zero-padding live in the block-diagonal row-shift matrices. ----
    z0 = jnp.dot(y, w0, preferred_element_type=jnp.float32)                 # (N*H, W*Cout)
    z1 = jnp.dot(y, w1, preferred_element_type=jnp.float32)
    z2 = jnp.dot(y, w2, preferred_element_type=jnp.float32)
    return (bias + z1
            + jnp.dot(sd, z0, preferred_element_type=jnp.float32)
            + jnp.dot(su, z2, preferred_element_type=jnp.float32))


def _double_conv_kernel(x_ref, sd_ref, su_ref,
                        g1_ref, be1_ref, s1_ref, e1_ref, w1_ref, bi1_ref,
                        g2_ref, be2_ref, s2_ref, e2_ref, w2_ref, bi2_ref,
                        out_ref):
    G = x_ref.shape[0]                               # N*H rows
    width = s1_ref.shape[0] // s1_ref.shape[1]       # spatial W
    n_pool = float(G * width)                        # BN pools over (N, H, W)
    sd = sd_ref[...]
    su = su_ref[...]
    h = _bn_relu_conv_stage(x_ref[...], g1_ref[...], be1_ref[...], s1_ref[...], e1_ref[...],
                            w1_ref[0], w1_ref[1], w1_ref[2], bi1_ref[...], sd, su, n_pool)
    out_ref[...] = _bn_relu_conv_stage(h, g2_ref[...], be2_ref[...], s2_ref[...], e2_ref[...],
                                       w2_ref[0], w2_ref[1], w2_ref[2], bi2_ref[...],
                                       sd, su, n_pool)


# ------------------------------- wrapper-side packing -------------------------------
def _pack_conv_weight(w_hwio, width):
    """(3,3,Cin,Cout) HWIO conv weights -> (3, W*Cin, W*Cout) block-banded matrices.

    Matrix dy maps a lane-packed input row (w-major, cin-minor) to a lane-packed output
    row, folding the three dx taps and the width-direction zero padding.
    """
    m = np.zeros((3, width, width), np.float32)       # m[dx, w_in, w_out]
    for dx in range(3):
        for wo in range(width):
            wi = wo + dx - 1
            if 0 <= wi < width:
                m[dx, wi, wo] = 1.0
    cin, cout = int(w_hwio.shape[2]), int(w_hwio.shape[3])
    wbd = jnp.einsum('dxio,xab->daibo', w_hwio.astype(jnp.float32), jnp.asarray(m))
    return wbd.reshape(3, width * cin, width * cout)


def _channel_maps(width, channels):
    """sel (W*C, C): folds lane groups into per-channel sums; exp = sel.T broadcasts back."""
    sel = np.tile(np.eye(channels, dtype=np.float32), (width, 1))
    return jnp.asarray(sel), jnp.asarray(sel.T)


def _row_shift_mats(n, h):
    """Block-diagonal (N*H, N*H) shift matrices for the dy=0 / dy=2 conv taps.

    sd @ z picks the previous row of the same image (zero at the top halo),
    su @ z picks the next row of the same image (zero at the bottom halo).
    """
    g = n * h
    sd = np.zeros((g, g), np.float32)
    su = np.zeros((g, g), np.float32)
    for b in range(n):
        for r in range(h):
            row = b * h + r
            if r >= 1:
                sd[row, row - 1] = 1.0
            if r <= h - 2:
                su[row, row + 1] = 1.0
    return jnp.asarray(sd), jnp.asarray(su)


@jax.jit
def pre_activate_double_conv(x_nchw, params):
    """Forward pass matching PreActivateDoubleConv. Input/output are NCHW (PyTorch layout)."""
    N, Cin, H, W = x_nchw.shape
    Cout = params["w1"].shape[-1]

    # NCHW -> lane-dense (N*H, W*Cin) packing (row = n*H + h; lane = w*Cin + c).
    x2d = jnp.transpose(x_nchw, (0, 2, 3, 1)).reshape(N * H, W * Cin).astype(jnp.float32)

    s1, e1 = _channel_maps(W, Cin)
    s2, e2 = _channel_maps(W, Cout)
    sd, su = _row_shift_mats(N, H)
    wbd1 = _pack_conv_weight(params["w1"], W)
    wbd2 = _pack_conv_weight(params["w2"], W)
    bias1_l = jnp.tile(params["b1"].astype(jnp.float32), W).reshape(1, W * Cout)
    bias2_l = jnp.tile(params["b2"].astype(jnp.float32), W).reshape(1, W * Cout)

    vmem = pl.BlockSpec(memory_space=pltpu.MemorySpace.VMEM)
    out2d = pl.pallas_call(
        _double_conv_kernel,
        out_shape=jax.ShapeDtypeStruct((N * H, W * Cout), jnp.float32),
        in_specs=[vmem] * 15,
        out_specs=vmem,
    )(
        x2d, sd, su,
        params["gamma1"].reshape(1, Cin).astype(jnp.float32),
        params["beta1"].reshape(1, Cin).astype(jnp.float32),
        s1, e1, wbd1, bias1_l,
        params["gamma2"].reshape(1, Cout).astype(jnp.float32),
        params["beta2"].reshape(1, Cout).astype(jnp.float32),
        s2, e2, wbd2, bias2_l,
    )
    return jnp.transpose(out2d.reshape(N, H, W, Cout), (0, 3, 1, 2))


# ----------------------- pure-JAX reference (for verification) -----------------------
def _ref_stage(x_nhwc, gamma, beta, w, bias):
    mean = x_nhwc.mean(axis=(0, 1, 2), keepdims=True)
    var = ((x_nhwc - mean) ** 2).mean(axis=(0, 1, 2), keepdims=True)
    y = (x_nhwc - mean) / jnp.sqrt(var + _EPS) * gamma + beta
    y = jnp.maximum(y, 0.0)
    out = jax.lax.conv_general_dilated(
        y, w, window_strides=(1, 1), padding=((1, 1), (1, 1)),
        dimension_numbers=("NHWC", "HWIO", "NHWC"))
    return out + bias


def _reference(x_nchw, params):
    x = jnp.transpose(x_nchw, (0, 2, 3, 1))
    h = _ref_stage(x, params["gamma1"], params["beta1"], params["w1"], params["b1"])
    y = _ref_stage(h, params["gamma2"], params["beta2"], params["w2"], params["b2"])
    return jnp.transpose(y, (0, 3, 1, 2))


if __name__ == "__main__":
    in_channels, out_channels = 4, 8
    N, H, W = 2, 16, 16

    key = jax.random.PRNGKey(0)
    keys = jax.random.split(key, 9)

    x = jax.random.normal(keys[0], (N, in_channels, H, W), jnp.float32)  # NCHW input

    # Deterministic synthetic parameters (shapes follow the module's __init__).
    params = {
        # BatchNorm2d(in_channels)
        "gamma1": 1.0 + 0.1 * jax.random.normal(keys[1], (in_channels,), jnp.float32),
        "beta1": 0.1 * jax.random.normal(keys[2], (in_channels,), jnp.float32),
        # Conv2d(in_channels, out_channels, 3, padding=1) -- weights stored HWIO
        "w1": 0.1 * jax.random.normal(keys[3], (3, 3, in_channels, out_channels), jnp.float32),
        "b1": 0.1 * jax.random.normal(keys[4], (out_channels,), jnp.float32),
        # BatchNorm2d(out_channels)
        "gamma2": 1.0 + 0.1 * jax.random.normal(keys[5], (out_channels,), jnp.float32),
        "beta2": 0.1 * jax.random.normal(keys[6], (out_channels,), jnp.float32),
        # Conv2d(out_channels, out_channels, 3, padding=1)
        "w2": 0.1 * jax.random.normal(keys[7], (3, 3, out_channels, out_channels), jnp.float32),
        "b2": 0.1 * jax.random.normal(keys[8], (out_channels,), jnp.float32),
    }

    out = jax.block_until_ready(pre_activate_double_conv(x, params))
    ref = jax.block_until_ready(_reference(x, params))

    assert out.shape == (N, out_channels, H, W), out.shape
    np.testing.assert_allclose(np.asarray(out), np.asarray(ref), rtol=1e-3, atol=1e-3)
    print("KERNEL_OK")
</pallas_src>

<mosaic_0001>
module attributes {stable_mosaic.version = 11 : i64} {
  func.func @_double_conv_kernel(%arg0: memref<32x64xf32, #tpu.memory_space<vmem>>, %arg1: memref<32x32xf32, #tpu.memory_space<vmem>>, %arg2: memref<32x32xf32, #tpu.memory_space<vmem>>, %arg3: memref<1x4xf32, #tpu.memory_space<vmem>>, %arg4: memref<1x4xf32, #tpu.memory_space<vmem>>, %arg5: memref<64x4xf32, #tpu.memory_space<vmem>>, %arg6: memref<4x64xf32, #tpu.memory_space<vmem>>, %arg7: memref<3x64x128xf32, #tpu.memory_space<vmem>>, %arg8: memref<1x128xf32, #tpu.memory_space<vmem>>, %arg9: memref<1x8xf32, #tpu.memory_space<vmem>>, %arg10: memref<1x8xf32, #tpu.memory_space<vmem>>, %arg11: memref<128x8xf32, #tpu.memory_space<vmem>>, %arg12: memref<8x128xf32, #tpu.memory_space<vmem>>, %arg13: memref<3x128x128xf32, #tpu.memory_space<vmem>>, %arg14: memref<1x128xf32, #tpu.memory_space<vmem>>, %arg15: memref<32x128xf32, #tpu.memory_space<vmem>>) attributes {dimension_semantics = [], scalar_prefetch = 0 : i64, scratch_operands = 0 : i64, tpu.core_type = #tpu.core_type<tc>} {
    %c0 = arith.constant 0 : index
    %c0_0 = arith.constant 0 : index
    %0 = vector.load %arg1[%c0, %c0_0] : memref<32x32xf32, #tpu.memory_space<vmem>>, vector<32x32xf32>
    %c0_1 = arith.constant 0 : index
    %c0_2 = arith.constant 0 : index
    %1 = vector.load %arg2[%c0_1, %c0_2] : memref<32x32xf32, #tpu.memory_space<vmem>>, vector<32x32xf32>
    %c0_3 = arith.constant 0 : index
    %c0_4 = arith.constant 0 : index
    %2 = vector.load %arg0[%c0_3, %c0_4] : memref<32x64xf32, #tpu.memory_space<vmem>>, vector<32x64xf32>
    %c0_5 = arith.constant 0 : index
    %c0_6 = arith.constant 0 : index
    %3 = vector.load %arg3[%c0_5, %c0_6] : memref<1x4xf32, #tpu.memory_space<vmem>>, vector<1x4xf32>
    %c0_7 = arith.constant 0 : index
    %c0_8 = arith.constant 0 : index
    %4 = vector.load %arg4[%c0_7, %c0_8] : memref<1x4xf32, #tpu.memory_space<vmem>>, vector<1x4xf32>
    %c0_9 = arith.constant 0 : index
    %c0_10 = arith.constant 0 : index
    %5 = vector.load %arg5[%c0_9, %c0_10] : memref<64x4xf32, #tpu.memory_space<vmem>>, vector<64x4xf32>
    %c0_11 = arith.constant 0 : index
    %c0_12 = arith.constant 0 : index
    %6 = vector.load %arg6[%c0_11, %c0_12] : memref<4x64xf32, #tpu.memory_space<vmem>>, vector<4x64xf32>
    %c0_13 = arith.constant 0 : index
    %c0_14 = arith.constant 0 : index
    %c0_15 = arith.constant 0 : index
    %7 = vector.load %arg7[%c0_13, %c0_14, %c0_15] : memref<3x64x128xf32, #tpu.memory_space<vmem>>, vector<1x64x128xf32>
    %8 = vector.shape_cast %7 : vector<1x64x128xf32> to vector<64x128xf32>
    %c1 = arith.constant 1 : index
    %c0_16 = arith.constant 0 : index
    %c0_17 = arith.constant 0 : index
    %9 = vector.load %arg7[%c1, %c0_16, %c0_17] : memref<3x64x128xf32, #tpu.memory_space<vmem>>, vector<1x64x128xf32>
    %10 = vector.shape_cast %9 : vector<1x64x128xf32> to vector<64x128xf32>
    %c2 = arith.constant 2 : index
    %c0_18 = arith.constant 0 : index
    %c0_19 = arith.constant 0 : index
    %11 = vector.load %arg7[%c2, %c0_18, %c0_19] : memref<3x64x128xf32, #tpu.memory_space<vmem>>, vector<1x64x128xf32>
    %12 = vector.shape_cast %11 : vector<1x64x128xf32> to vector<64x128xf32>
    %c0_20 = arith.constant 0 : index
    %c0_21 = arith.constant 0 : index
    %13 = vector.load %arg8[%c0_20, %c0_21] : memref<1x128xf32, #tpu.memory_space<vmem>>, vector<1x128xf32>
    %cst = arith.constant dense<0.000000e+00> : vector<64xf32>
    %14 = vector.multi_reduction <add>, %2, %cst [0] : vector<32x64xf32> to vector<64xf32>
    %15 = vector.shape_cast %14 : vector<64xf32> to vector<1x64xf32>
    %cst_22 = arith.constant dense<0.000000e+00> : vector<1x4xf32>
    %16 = tpu.matmul %15, %5, %cst_22 {dimension_numbers = #tpu.dot_dimension_numbers<[1], [0], [0], [1], [0, 0, 1, 1], [], []>} : vector<1x64xf32>, vector<64x4xf32>, vector<1x4xf32> -> vector<1x4xf32>
    %cst_23 = arith.constant 0.001953125 : f32
    %17 = vector.broadcast %cst_23 : f32 to vector<1x4xf32>
    %18 = arith.mulf %16, %17 : vector<1x4xf32>
    %cst_24 = arith.constant dense<0.000000e+00> : vector<1x64xf32>
    %19 = tpu.matmul %18, %6, %cst_24 {dimension_numbers = #tpu.dot_dimension_numbers<[1], [0], [0], [1], [0, 0, 1, 1], [], []>} : vector<1x4xf32>, vector<4x64xf32>, vector<1x64xf32> -> vector<1x64xf32>
    %20 = vector.broadcast %19 : vector<1x64xf32> to vector<32x64xf32>
    %21 = arith.subf %2, %20 : vector<32x64xf32>
    %22 = arith.mulf %21, %21 : vector<32x64xf32>
    %cst_25 = arith.constant dense<0.000000e+00> : vector<64xf32>
    %23 = vector.multi_reduction <add>, %22, %cst_25 [0] : vector<32x64xf32> to vector<64xf32>
    %24 = vector.shape_cast %23 : vector<64xf32> to vector<1x64xf32>
    %cst_26 = arith.constant dense<0.000000e+00> : vector<1x4xf32>
    %25 = tpu.matmul %24, %5, %cst_26 {dimension_numbers = #tpu.dot_dimension_numbers<[1], [0], [0], [1], [0, 0, 1, 1], [], []>} : vector<1x64xf32>, vector<64x4xf32>, vector<1x4xf32> -> vector<1x4xf32>
    %cst_27 = arith.constant 0.001953125 : f32
    %26 = vector.broadcast %cst_27 : f32 to vector<1x4xf32>
    %27 = arith.mulf %25, %26 : vector<1x4xf32>
    %cst_28 = arith.constant 9.99999974E-6 : f32
    %28 = vector.broadcast %cst_28 : f32 to vector<1x4xf32>
    %29 = arith.addf %27, %28 : vector<1x4xf32>
    %30 = math.rsqrt %29 : vector<1x4xf32>
    %31 = arith.mulf %3, %30 : vector<1x4xf32>
    %cst_29 = arith.constant dense<0.000000e+00> : vector<1x64xf32>
    %32 = tpu.matmul %31, %6, %cst_29 {dimension_numbers = #tpu.dot_dimension_numbers<[1], [0], [0], [1], [0, 0, 1, 1], [], []>} : vector<1x4xf32>, vector<4x64xf32>, vector<1x64xf32> -> vector<1x64xf32>
    %cst_30 = arith.constant dense<0.000000e+00> : vector<1x64xf32>
    %33 = tpu.matmul %4, %6, %cst_30 {dimension_numbers = #tpu.dot_dimension_numbers<[1], [0], [0], [1], [0, 0, 1, 1], [], []>} : vector<1x4xf32>, vector<4x64xf32>, vector<1x64xf32> -> vector<1x64xf32>
    %34 = vector.broadcast %32 : vector<1x64xf32> to vector<32x64xf32>
    %35 = arith.mulf %21, %34 : vector<32x64xf32>
    %36 = vector.broadcast %33 : vector<1x64xf32> to vector<32x64xf32>
    %37 = arith.addf %35, %36 : vector<32x64xf32>
    %cst_31 = arith.constant 0.000000e+00 : f32
    %38 = vector.broadcast %cst_31 : f32 to vector<32x64xf32>
    %39 = arith.maximumf %37, %38 : vector<32x64xf32>
    %cst_32 = arith.constant dense<0.000000e+00> : vector<32x128xf32>
    %40 = tpu.matmul %39, %8, %cst_32 {dimension_numbers = #tpu.dot_dimension_numbers<[1], [0], [0], [1], [0, 0, 1, 1], [], []>} : vector<32x64xf32>, vector<64x128xf32>, vector<32x128xf32> -> vector<32x128xf32>
    %cst_33 = arith.constant dense<0.000000e+00> : vector<32x128xf32>
    %41 = tpu.matmul %39, %10, %cst_33 {dimension_numbers = #tpu.dot_dimension_numbers<[1], [0], [0], [1], [0, 0, 1, 1], [], []>} : vector<32x64xf32>, vector<64x128xf32>, vector<32x128xf32> -> vector<32x128xf32>
    %cst_34 = arith.constant dense<0.000000e+00> : vector<32x128xf32>
    %42 = tpu.matmul %39, %12, %cst_34 {dimension_numbers = #tpu.dot_dimension_numbers<[1], [0], [0], [1], [0, 0, 1, 1], [], []>} : vector<32x64xf32>, vector<64x128xf32>, vector<32x128xf32> -> vector<32x128xf32>
    %43 = vector.broadcast %13 : vector<1x128xf32> to vector<32x128xf32>
    %44 = arith.addf %43, %41 : vector<32x128xf32>
    %cst_35 = arith.constant dense<0.000000e+00> : vector<32x128xf32>
    %45 = tpu.matmul %0, %40, %cst_35 {dimension_numbers = #tpu.dot_dimension_numbers<[1], [0], [0], [1], [0, 0, 1, 1], [], []>} : vector<32x32xf32>, vector<32x128xf32>, vector<32x128xf32> -> vector<32x128xf32>
    %46 = arith.addf %44, %45 : vector<32x128xf32>
    %cst_36 = arith.constant dense<0.000000e+00> : vector<32x128xf32>
    %47 = tpu.matmul %1, %42, %cst_36 {dimension_numbers = #tpu.dot_dimension_numbers<[1], [0], [0], [1], [0, 0, 1, 1], [], []>} : vector<32x32xf32>, vector<32x128xf32>, vector<32x128xf32> -> vector<32x128xf32>
    %48 = arith.addf %46, %47 : vector<32x128xf32>
    %c0_37 = arith.constant 0 : index
    %c0_38 = arith.constant 0 : index
    %49 = vector.load %arg9[%c0_37, %c0_38] : memref<1x8xf32, #tpu.memory_space<vmem>>, vector<1x8xf32>
    %c0_39 = arith.constant 0 : index
    %c0_40 = arith.constant 0 : index
    %50 = vector.load %arg10[%c0_39, %c0_40] : memref<1x8xf32, #tpu.memory_space<vmem>>, vector<1x8xf32>
    %c0_41 = arith.constant 0 : index
    %c0_42 = arith.constant 0 : index
    %51 = vector.load %arg11[%c0_41, %c0_42] : memref<128x8xf32, #tpu.memory_space<vmem>>, vector<128x8xf32>
    %c0_43 = arith.constant 0 : index
    %c0_44 = arith.constant 0 : index
    %52 = vector.load %arg12[%c0_43, %c0_44] : memref<8x128xf32, #tpu.memory_space<vmem>>, vector<8x128xf32>
    %c0_45 = arith.constant 0 : index
    %c0_46 = arith.constant 0 : index
    %c0_47 = arith.constant 0 : index
    %53 = vector.load %arg13[%c0_45, %c0_46, %c0_47] : memref<3x128x128xf32, #tpu.memory_space<vmem>>, vector<1x128x128xf32>
    %54 = vector.shape_cast %53 : vector<1x128x128xf32> to vector<128x128xf32>
    %c1_48 = arith.constant 1 : index
    %c0_49 = arith.constant 0 : index
    %c0_50 = arith.constant 0 : index
    %55 = vector.load %arg13[%c1_48, %c0_49, %c0_50] : memref<3x128x128xf32, #tpu.memory_space<vmem>>, vector<1x128x128xf32>
    %56 = vector.shape_cast %55 : vector<1x128x128xf32> to vector<128x128xf32>
    %c2_51 = arith.constant 2 : index
    %c0_52 = arith.constant 0 : index
    %c0_53 = arith.constant 0 : index
    %57 = vector.load %arg13[%c2_51, %c0_52, %c0_53] : memref<3x128x128xf32, #tpu.memory_space<vmem>>, vector<1x128x128xf32>
    %58 = vector.shape_cast %57 : vector<1x128x128xf32> to vector<128x128xf32>
    %c0_54 = arith.constant 0 : index
    %c0_55 = arith.constant 0 : index
    %59 = vector.load %arg14[%c0_54, %c0_55] : memref<1x128xf32, #tpu.memory_space<vmem>>, vector<1x128xf32>
    %cst_56 = arith.constant dense<0.000000e+00> : vector<128xf32>
    %60 = vector.multi_reduction <add>, %48, %cst_56 [0] : vector<32x128xf32> to vector<128xf32>
    %61 = vector.shape_cast %60 : vector<128xf32> to vector<1x128xf32>
    %cst_57 = arith.constant dense<0.000000e+00> : vector<1x8xf32>
    %62 = tpu.matmul %61, %51, %cst_57 {dimension_numbers = #tpu.dot_dimension_numbers<[1], [0], [0], [1], [0, 0, 1, 1], [], []>} : vector<1x128xf32>, vector<128x8xf32>, vector<1x8xf32> -> vector<1x8xf32>
    %cst_58 = arith.constant 0.001953125 : f32
    %63 = vector.broadcast %cst_58 : f32 to vector<1x8xf32>
    %64 = arith.mulf %62, %63 : vector<1x8xf32>
    %cst_59 = arith.constant dense<0.000000e+00> : vector<1x128xf32>
    %65 = tpu.matmul %64, %52, %cst_59 {dimension_numbers = #tpu.dot_dimension_numbers<[1], [0], [0], [1], [0, 0, 1, 1], [], []>} : vector<1x8xf32>, vector<8x128xf32>, vector<1x128xf32> -> vector<1x128xf32>
    %66 = vector.broadcast %65 : vector<1x128xf32> to vector<32x128xf32>
    %67 = arith.subf %48, %66 : vector<32x128xf32>
    %68 = arith.mulf %67, %67 : vector<32x128xf32>
    %cst_60 = arith.constant dense<0.000000e+00> : vector<128xf32>
    %69 = vector.multi_reduction <add>, %68, %cst_60 [0] : vector<32x128xf32> to vector<128xf32>
    %70 = vector.shape_cast %69 : vector<128xf32> to vector<1x128xf32>
    %cst_61 = arith.constant dense<0.000000e+00> : vector<1x8xf32>
    %71 = tpu.matmul %70, %51, %cst_61 {dimension_numbers = #tpu.dot_dimension_numbers<[1], [0], [0], [1], [0, 0, 1, 1], [], []>} : vector<1x128xf32>, vector<128x8xf32>, vector<1x8xf32> -> vector<1x8xf32>
    %cst_62 = arith.constant 0.001953125 : f32
    %72 = vector.broadcast %cst_62 : f32 to vector<1x8xf32>
    %73 = arith.mulf %71, %72 : vector<1x8xf32>
    %cst_63 = arith.constant 9.99999974E-6 : f32
    %74 = vector.broadcast %cst_63 : f32 to vector<1x8xf32>
    %75 = arith.addf %73, %74 : vector<1x8xf32>
    %76 = math.rsqrt %75 : vector<1x8xf32>
    %77 = arith.mulf %49, %76 : vector<1x8xf32>
    %cst_64 = arith.constant dense<0.000000e+00> : vector<1x128xf32>
    %78 = tpu.matmul %77, %52, %cst_64 {dimension_numbers = #tpu.dot_dimension_numbers<[1], [0], [0], [1], [0, 0, 1, 1], [], []>} : vector<1x8xf32>, vector<8x128xf32>, vector<1x128xf32> -> vector<1x128xf32>
    %cst_65 = arith.constant dense<0.000000e+00> : vector<1x128xf32>
    %79 = tpu.matmul %50, %52, %cst_65 {dimension_numbers = #tpu.dot_dimension_numbers<[1], [0], [0], [1], [0, 0, 1, 1], [], []>} : vector<1x8xf32>, vector<8x128xf32>, vector<1x128xf32> -> vector<1x128xf32>
    %80 = vector.broadcast %78 : vector<1x128xf32> to vector<32x128xf32>
    %81 = arith.mulf %67, %80 : vector<32x128xf32>
    %82 = vector.broadcast %79 : vector<1x128xf32> to vector<32x128xf32>
    %83 = arith.addf %81, %82 : vector<32x128xf32>
    %cst_66 = arith.constant 0.000000e+00 : f32
    %84 = vector.broadcast %cst_66 : f32 to vector<32x128xf32>
    %85 = arith.maximumf %83, %84 : vector<32x128xf32>
    %cst_67 = arith.constant dense<0.000000e+00> : vector<32x128xf32>
    %86 = tpu.matmul %85, %54, %cst_67 {dimension_numbers = #tpu.dot_dimension_numbers<[1], [0], [0], [1], [0, 0, 1, 1], [], []>} : vector<32x128xf32>, vector<128x128xf32>, vector<32x128xf32> -> vector<32x128xf32>
    %cst_68 = arith.constant dense<0.000000e+00> : vector<32x128xf32>
    %87 = tpu.matmul %85, %56, %cst_68 {dimension_numbers = #tpu.dot_dimension_numbers<[1], [0], [0], [1], [0, 0, 1, 1], [], []>} : vector<32x128xf32>, vector<128x128xf32>, vector<32x128xf32> -> vector<32x128xf32>
    %cst_69 = arith.constant dense<0.000000e+00> : vector<32x128xf32>
    %88 = tpu.matmul %85, %58, %cst_69 {dimension_numbers = #tpu.dot_dimension_numbers<[1], [0], [0], [1], [0, 0, 1, 1], [], []>} : vector<32x128xf32>, vector<128x128xf32>, vector<32x128xf32> -> vector<32x128xf32>
    %89 = vector.broadcast %59 : vector<1x128xf32> to vector<32x128xf32>
    %90 = arith.addf %89, %87 : vector<32x128xf32>
    %cst_70 = arith.constant dense<0.000000e+00> : vector<32x128xf32>
    %91 = tpu.matmul %0, %86, %cst_70 {dimension_numbers = #tpu.dot_dimension_numbers<[1], [0], [0], [1], [0, 0, 1, 1], [], []>} : vector<32x32xf32>, vector<32x128xf32>, vector<32x128xf32> -> vector<32x128xf32>
    %92 = arith.addf %90, %91 : vector<32x128xf32>
    %cst_71 = arith.constant dense<0.000000e+00> : vector<32x128xf32>
    %93 = tpu.matmul %1, %88, %cst_71 {dimension_numbers = #tpu.dot_dimension_numbers<[1], [0], [0], [1], [0, 0, 1, 1], [], []>} : vector<32x32xf32>, vector<32x128xf32>, vector<32x128xf32> -> vector<32x128xf32>
    %94 = arith.addf %92, %93 : vector<32x128xf32>
    %c0_72 = arith.constant 0 : index
    %c0_73 = arith.constant 0 : index
    %95 = vector.load %arg15[%c0_72, %c0_73] : memref<32x128xf32, #tpu.memory_space<vmem>>, vector<32x128xf32>
    tpu.vector_store %arg15[%c0_72, %c0_73], %94 {strides = array<i32>} : memref<32x128xf32, #tpu.memory_space<vmem>>, vector<32x128xf32>,
    return
  }
}

</mosaic_0001>

<llo_original>
// kernel: tile.13
$region0: #{tile.13}
  #allocation0 [shape = 's32[1]{0}', space=sflag, size = 0x4, scoped, tag = 'scoped memory for tile.13']
  %s0 = inlined_call_operand.vmem [shape: f32[8], index: 0, kind: input, shape index: {}]
  %s1 = inlined_call_operand.vmem [shape: f32[16,8], index: 1, kind: output, shape index: {}]
  // Predicated region
  $region2: #{tile.13} parent=0 // pred_check
    _
  $region3: #{tile.13} parent=0 // pred_check_branch
    %3 = sbr.rel (0) target = $region5
  $region4: #{tile.13} parent=0 // pred_region
    _
  $region5: #{tile.13} parent=0 // pred_fallthru
    _
  %v4 = vld [vmem:[%s0] ss:$0 sm:$0xff]
  %5 = vst [vmem:[%s1] sm:$0xff] %v4
  %s6 = scalar_lea.vmem %s1, 8
  %7 = vst [vmem:[%s6] sm:$0xff] %v4

// kernel: tile.14
$region0: #{tile.14}
  %s0 = inlined_call_operand.vmem [shape: f32[16,8], index: 0, kind: input, shape index: {}]
  %s1 = inlined_call_operand.vmem [shape: f32[1,128], index: 1, kind: output, shape index: {}]
  $region1: #{tile.14} parent=0
    #allocation0 [shape = 'u8[4096]{0}', space=vmem, size = 0x1000, scoped, tag = 'scoped mem for output reshape']
    %v2 = vld [vmem:[%s0] sm:$0x1]
    %vm3 = vcmask 64512
    %4 = vst.msk [vmem:[#allocation0] sm:$0x1] %vm3, %v2
    %s5 = scalar_lea.vmem %s0, 15
    %v6 = vld [vmem:[%s5] sm:$0x1]
    %7 = vrot.lane.b32.xlu0 %v6, 120
    %v8 = vpop.permute.xlu0 %7
    %vm9 = vcmask 1048512
    %10 = vst.msk [vmem:[#allocation0] sm:$0x1] %vm9, %v8
    %s11 = scalar_lea.vmem %s0, 14
    %v12 = vld [vmem:[%s11] sm:$0x1]
    %13 = vrot.lane.b32.xlu0 %v12, 112
    %v14 = vpop.permute.xlu0 %13
    %vm15 = vcmask 982912
    %16 = vst.msk [vmem:[#allocation0] sm:$0x1] %vm15, %v14
    %s17 = scalar_lea.vmem %s0, 13
    %v18 = vld [vmem:[%s17] sm:$0x1]
    %19 = vrot.lane.b32.xlu0 %v18, 104
    %v20 = vpop.permute.xlu0 %19
    %vm21 = vcmask 917312
    %22 = vst.msk [vmem:[#allocation0] sm:$0x1] %vm21, %v20
    %s23 = scalar_lea.vmem %s0, 12
    %v24 = vld [vmem:[%s23] sm:$0x1]
    %25 = vrot.lane.b32.xlu0 %v24, 96
    %v26 = vpop.permute.xlu0 %25
    %vm27 = vcmask 851712
    %28 = vst.msk [vmem:[#allocation0] sm:$0x1] %vm27, %v26
    %s29 = scalar_lea.vmem %s0, 11
    %v30 = vld [vmem:[%s29] sm:$0x1]
    %31 = vrot.lane.b32.xlu0 %v30, 88
    %v32 = vpop.permute.xlu0 %31
    %vm33 = vcmask 786112
    %34 = vst.msk [vmem:[#allocation0] sm:$0x1] %vm33, %v32
    %s35 = scalar_lea.vmem %s0, 10
    %v36 = vld [vmem:[%s35] sm:$0x1]
    %37 = vrot.lane.b32.xlu0 %v36, 80
    %v38 = vpop.permute.xlu0 %37
    %vm39 = vcmask 720512
    %40 = vst.msk [vmem:[#allocation0] sm:$0x1] %vm39, %v38
    %s41 = scalar_lea.vmem %s0, 9
    %v42 = vld [vmem:[%s41] sm:$0x1]
    %43 = vrot.lane.b32.xlu0 %v42, 72
    %v44 = vpop.permute.xlu0 %43
    %vm45 = vcmask 654912
    %46 = vst.msk [vmem:[#allocation0] sm:$0x1] %vm45, %v44
    %s47 = scalar_lea.vmem %s0, 8
    %v48 = vld [vmem:[%s47] sm:$0x1]
    %49 = vrot.lane.b32.xlu0 %v48, 64
    %v50 = vpop.permute.xlu0 %49
    %vm51 = vcmask 589312
    %52 = vst.msk [vmem:[#allocation0] sm:$0x1] %vm51, %v50
    %s53 = scalar_lea.vmem %s0, 7
    %v54 = vld [vmem:[%s53] sm:$0x1]
    %55 = vrot.lane.b32.xlu0 %v54, 56
    %v56 = vpop.permute.xlu0 %55
    %vm57 = vcmask 523712
    %58 = vst.msk [vmem:[#allocation0] sm:$0x1] %vm57, %v56
    %s59 = scalar_lea.vmem %s0, 6
    %v60 = vld [vmem:[%s59] sm:$0x1]
    %61 = vrot.lane.b32.xlu0 %v60, 48
    %v62 = vpop.permute.xlu0 %61
    %vm63 = vcmask 458112
    %64 = vst.msk [vmem:[#allocation0] sm:$0x1] %vm63, %v62
    %s65 = scalar_lea.vmem %s0, 5
    %v66 = vld [vmem:[%s65] sm:$0x1]
    %67 = vrot.lane.b32.xlu0 %v66, 40
    %v68 = vpop.permute.xlu0 %67
    %vm69 = vcmask 392512
    %70 = vst.msk [vmem:[#allocation0] sm:$0x1] %vm69, %v68
    %s71 = scalar_lea.vmem %s0, 4
    %v72 = vld [vmem:[%s71] sm:$0x1]
    %73 = vrot.lane.b32.xlu0 %v72, 32
    %v74 = vpop.permute.xlu0 %73
    %vm75 = vcmask 326912
    %76 = vst.msk [vmem:[#allocation0] sm:$0x1] %vm75, %v74
    %s77 = scalar_lea.vmem %s0, 3
    %v78 = vld [vmem:[%s77] sm:$0x1]
    %79 = vrot.lane.b32.xlu0 %v78, 24
    %v80 = vpop.permute.xlu0 %79
    %vm81 = vcmask 261312
    %82 = vst.msk [vmem:[#allocation0] sm:$0x1] %vm81, %v80
    %s83 = scalar_lea.vmem %s0, 2
    %v84 = vld [vmem:[%s83] sm:$0x1]
    %85 = vrot.lane.b32.xlu0 %v84, 16
    %v86 = vpop.permute.xlu0 %85
    %vm87 = vcmask 195712
    %88 = vst.msk [vmem:[#allocation0] sm:$0x1] %vm87, %v86
    %s89 = scalar_lea.vmem %s0, 1
    %v90 = vld [vmem:[%s89] sm:$0x1]
    %91 = vrot.lane.b32.xlu0 %v90, 8
    %v92 = vpop.permute.xlu0 %91
    %vm93 = vcmask 130112
    %94 = vst.msk [vmem:[#allocation0] sm:$0x1] %vm93, %v92
    %s96 = sshll.u32 1, 1
    %s97 = ssub.s32 %s96, 1
    %v99 = vld [vmem:[#allocation0] sm:%s97]
    %s100 = sshll.u32 1, 1
    %s101 = ssub.s32 %s100, 1
    %102 = vst [vmem:[%s1] sm:%s101] %v99

// kernel: pre_activate_double_conv.1
$region0: #{pre_activate_double_conv.1}
  #allocation0 [shape = 'u32[]', space=smem, size = 0x4, offset = 0x4, fixed_abs, tag = 'smem constant byte address 0x4 - core index']
  #allocation1 [shape = 'u32[144,128]{1,0:T(1,128)}', space=vmem, size = 0x12000, scoped, tag = 'internal scratch']
  %s0 = inlined_call_operand.vmem [shape: f32[32,64], index: 0, kind: input, shape index: {}]
  %s1 = inlined_call_operand.vmem [shape: f32[32,32], index: 1, kind: input, shape index: {}]
  %s2 = inlined_call_operand.vmem [shape: f32[32,32], index: 2, kind: input, shape index: {}]
  %s3 = inlined_call_operand.vmem [shape: f32[1,4], index: 3, kind: input, shape index: {}]
  %s4 = inlined_call_operand.vmem [shape: f32[1,4], index: 4, kind: input, shape index: {}]
  %s5 = inlined_call_operand.vmem [shape: f32[64,4], index: 5, kind: input, shape index: {}]
  %s6 = inlined_call_operand.vmem [shape: f32[4,64], index: 6, kind: input, shape index: {}]
  %s7 = inlined_call_operand.vmem [shape: f32[3,64,128], index: 7, kind: input, shape index: {}]
  %s8 = inlined_call_operand.vmem [shape: f32[1,128], index: 8, kind: input, shape index: {}]
  %s9 = inlined_call_operand.vmem [shape: f32[1,8], index: 9, kind: input, shape index: {}]
  %s10 = inlined_call_operand.vmem [shape: f32[1,8], index: 10, kind: input, shape index: {}]
  %s11 = inlined_call_operand.vmem [shape: f32[128,8], index: 11, kind: input, shape index: {}]
  %s12 = inlined_call_operand.vmem [shape: f32[8,128], index: 12, kind: input, shape index: {}]
  %s13 = inlined_call_operand.vmem [shape: f32[3,128,128], index: 13, kind: input, shape index: {}]
  %s14 = inlined_call_operand.vmem [shape: f32[1,128], index: 14, kind: input, shape index: {}]
  %s15 = inlined_call_operand.vmem [shape: f32[32,128], index: 15, kind: output, shape index: {}]
  %s16 = sld [smem:[#allocation0]]
  $region70: #{pre_activate_double_conv.1} parent=0
    _
  %s18 = ssub.s32 1, %s16
  %s19 = scalar_select 0, %s18, %s16
  // Predicated region
  $region2: #{pre_activate_double_conv.1} parent=0 // pred_check
    _
  $region3: #{pre_activate_double_conv.1} parent=0 // pred_check_branch
    %21 = sbr.rel (0) target = $region5
  $region4: #{pre_activate_double_conv.1} parent=0 // pred_region
    _
  $region5: #{pre_activate_double_conv.1} parent=0 // pred_fallthru
    _
  // Predicated region
  $region6: #{pre_activate_double_conv.1} parent=0 // pred_check
    _
  $region7: #{pre_activate_double_conv.1} parent=0 // pred_check_branch
    %23 = sbr.rel (0) target = $region9
  $region8: #{pre_activate_double_conv.1} parent=0 // pred_region
    _
  $region9: #{pre_activate_double_conv.1} parent=0 // pred_fallthru
    _
  // Predicated region
  $region10: #{pre_activate_double_conv.1} parent=0 // pred_check
    _
  $region11: #{pre_activate_double_conv.1} parent=0 // pred_check_branch
    %25 = sbr.rel (0) target = $region13
  $region12: #{pre_activate_double_conv.1} parent=0 // pred_region
    _
  $region13: #{pre_activate_double_conv.1} parent=0 // pred_fallthru
    _
  // Predicated region
  $region14: #{pre_activate_double_conv.1} parent=0 // pred_check
    _
  $region15: #{pre_activate_double_conv.1} parent=0 // pred_check_branch
    %27 = sbr.rel (0) target = $region17
  $region16: #{pre_activate_double_conv.1} parent=0 // pred_region
    _
  $region17: #{pre_activate_double_conv.1} parent=0 // pred_fallthru
    _
  // Predicated region
  $region18: #{pre_activate_double_conv.1} parent=0 // pred_check
    _
  $region19: #{pre_activate_double_conv.1} parent=0 // pred_check_branch
    %29 = sbr.rel (0) target = $region21
  $region20: #{pre_activate_double_conv.1} parent=0 // pred_region
    _
  $region21: #{pre_activate_double_conv.1} parent=0 // pred_fallthru
    _
  // Predicated region
  $region22: #{pre_activate_double_conv.1} parent=0 // pred_check
    _
  $region23: #{pre_activate_double_conv.1} parent=0 // pred_check_branch
    %31 = sbr.rel (0) target = $region25
  $region24: #{pre_activate_double_conv.1} parent=0 // pred_region
    _
  $region25: #{pre_activate_double_conv.1} parent=0 // pred_fallthru
    _
  // Predicated region
  $region26: #{pre_activate_double_conv.1} parent=0 // pred_check
    _
  $region27: #{pre_activate_double_conv.1} parent=0 // pred_check_branch
    %33 = sbr.rel (0) target = $region29
  $region28: #{pre_activate_double_conv.1} parent=0 // pred_region
    _
  $region29: #{pre_activate_double_conv.1} parent=0 // pred_fallthru
    _
  // Predicated region
  $region30: #{pre_activate_double_conv.1} parent=0 // pred_check
    _
  $region31: #{pre_activate_double_conv.1} parent=0 // pred_check_branch
    %35 = sbr.rel (0) target = $region33
  $region32: #{pre_activate_double_conv.1} parent=0 // pred_region
    _
  $region33: #{pre_activate_double_conv.1} parent=0 // pred_fallthru
    _
  // Predicated region
  $region34: #{pre_activate_double_conv.1} parent=0 // pred_check
    _
  $region35: #{pre_activate_double_conv.1} parent=0 // pred_check_branch
    %37 = sbr.rel (0) target = $region37
  $region36: #{pre_activate_double_conv.1} parent=0 // pred_region
    _
  $region37: #{pre_activate_double_conv.1} parent=0 // pred_fallthru
    _
  // Predicated region
  $region38: #{pre_activate_double_conv.1} parent=0 // pred_check
    _
  $region39: #{pre_activate_double_conv.1} parent=0 // pred_check_branch
    %39 = sbr.rel (0) target = $region41
  $region40: #{pre_activate_double_conv.1} parent=0 // pred_region
    _
  $region41: #{pre_activate_double_conv.1} parent=0 // pred_fallthru
    _
  // Predicated region
  $region42: #{pre_activate_double_conv.1} parent=0 // pred_check
    _
  $region43: #{pre_activate_double_conv.1} parent=0 // pred_check_branch
    %41 = sbr.rel (0) target = $region45
  $region44: #{pre_activate_double_conv.1} parent=0 // pred_region
    _
  $region45: #{pre_activate_double_conv.1} parent=0 // pred_fallthru
    _
  // Predicated region
  $region46: #{pre_activate_double_conv.1} parent=0 // pred_check
    _
  $region47: #{pre_activate_double_conv.1} parent=0 // pred_check_branch
    %43 = sbr.rel (0) target = $region49
  $region48: #{pre_activate_double_conv.1} parent=0 // pred_region
    _
  $region49: #{pre_activate_double_conv.1} parent=0 // pred_fallthru
    _
  // Predicated region
  $region50: #{pre_activate_double_conv.1} parent=0 // pred_check
    _
  $region51: #{pre_activate_double_conv.1} parent=0 // pred_check_branch
    %45 = sbr.rel (0) target = $region53
  $region52: #{pre_activate_double_conv.1} parent=0 // pred_region
    _
  $region53: #{pre_activate_double_conv.1} parent=0 // pred_fallthru
    _
  // Predicated region
  $region54: #{pre_activate_double_conv.1} parent=0 // pred_check
    _
  $region55: #{pre_activate_double_conv.1} parent=0 // pred_check_branch
    %47 = sbr.rel (0) target = $region57
  $region56: #{pre_activate_double_conv.1} parent=0 // pred_region
    _
  $region57: #{pre_activate_double_conv.1} parent=0 // pred_fallthru
    _
  // Predicated region
  $region58: #{pre_activate_double_conv.1} parent=0 // pred_check
    _
  $region59: #{pre_activate_double_conv.1} parent=0 // pred_check_branch
    %49 = sbr.rel (0) target = $region61
  $region60: #{pre_activate_double_conv.1} parent=0 // pred_region
    _
  $region61: #{pre_activate_double_conv.1} parent=0 // pred_fallthru
    _
  %v50 = vld [vmem:[%s1] sm:$0xff]
  %v51 = vld [vmem:[%s1 + $0x8] sm:$0xff]
  %v52 = vld [vmem:[%s1 + $0x10] sm:$0xff]
  %v53 = vld [vmem:[%s1 + $0x18] sm:$0xff]
  %v54 = vld [vmem:[%s2] sm:$0xff]
  %v55 = vld [vmem:[%s2 + $0x8] sm:$0xff]
  %v56 = vld [vmem:[%s2 + $0x10] sm:$0xff]
  %v57 = vld [vmem:[%s2 + $0x18] sm:$0xff]
  %v58 = vld [vmem:[%s0] sm:$0xff]
  %v59 = vld [vmem:[%s0 + $0x8] sm:$0xff]
  %v60 = vld [vmem:[%s0 + $0x10] sm:$0xff]
  %v61 = vld [vmem:[%s0 + $0x18] sm:$0xff]
  %v62 = vld [vmem:[%s3] sm:$0x1]
  %v63 = vld [vmem:[%s4] sm:$0x1]
  %v64 = vld [vmem:[%s5] sm:$0xff]
  %v65 = vld [vmem:[%s5 + $0x8] sm:$0xff]
  %v66 = vld [vmem:[%s5 + $0x10] sm:$0xff]
  %v67 = vld [vmem:[%s5 + $0x18] sm:$0xff]
  %v68 = vld [vmem:[%s5 + $0x20] sm:$0xff]
  %v69 = vld [vmem:[%s5 + $0x28] sm:$0xff]
  %v70 = vld [vmem:[%s5 + $0x30] sm:$0xff]
  %v71 = vld [vmem:[%s5 + $0x38] sm:$0xff]
  %v72 = vld [vmem:[%s6] sm:$0xf]
  %v73 = vld [vmem:[%s7] sm:$0xff]
  %v74 = vld [vmem:[%s7 + $0x8] sm:$0xff]
  %v75 = vld [vmem:[%s7 + $0x10] sm:$0xff]
  %v76 = vld [vmem:[%s7 + $0x18] sm:$0xff]
  %v77 = vld [vmem:[%s7 + $0x20] sm:$0xff]
  %v78 = vld [vmem:[%s7 + $0x28] sm:$0xff]
  %v79 = vld [vmem:[%s7 + $0x30] sm:$0xff]
  %v80 = vld [vmem:[%s7 + $0x38] sm:$0xff]
  %s81 = scalar_lea.vmem %s7, 64
  %v82 = vld [vmem:[%s81] sm:$0xff]
  %v83 = vld [vmem:[%s81 + $0x8] sm:$0xff]
  %v84 = vld [vmem:[%s81 + $0x10] sm:$0xff]
  %v85 = vld [vmem:[%s81 + $0x18] sm:$0xff]
  %v86 = vld [vmem:[%s81 + $0x20] sm:$0xff]
  %v87 = vld [vmem:[%s81 + $0x28] sm:$0xff]
  %v88 = vld [vmem:[%s81 + $0x30] sm:$0xff]
  %v89 = vld [vmem:[%s81 + $0x38] sm:$0xff]
  %s90 = scalar_lea.vmem %s7, 128
  %v91 = vld [vmem:[%s90] sm:$0xff]
  %v92 = vld [vmem:[%s90 + $0x8] sm:$0xff]
  %v93 = vld [vmem:[%s90 + $0x10] sm:$0xff]
  %v94 = vld [vmem:[%s90 + $0x18] sm:$0xff]
  %v95 = vld [vmem:[%s90 + $0x20] sm:$0xff]
  %v96 = vld [vmem:[%s90 + $0x28] sm:$0xff]
  %v97 = vld [vmem:[%s90 + $0x30] sm:$0xff]
  %v98 = vld [vmem:[%s90 + $0x38] sm:$0xff]
  %v99 = vld [vmem:[%s8] sm:$0x1]
  %vm100 = vcmask 523264
  %v101 = vsel %vm100, %v58, 0.0
  %v102 = vsel %vm100, %v59, 0.0
  %v103 = vadd.f32 %v101, %v102
  %v104 = vsel %vm100, %v60, 0.0
  %v105 = vadd.f32 %v103, %v104
  %v106 = vsel %vm100, %v61, 0.0
  %v107 = vadd.f32 %v105, %v106
  %v108 = vrot.slane %v107, 4
  %v109 = vadd.f32 %v107, %v108
  %v110 = vrot.slane %v109, 2
  %v111 = vadd.f32 %v109, %v110
  %v112 = vrot.slane %v111, 1
  %v113 = vadd.f32 %v111, %v112
  %v115 = vsel %vm100, %v113, 0
  %117 = vmatprep.subr.mxu0 0.0
  %118 = vmatpush1.msra.mxu0 0.0
  %119 = vmatprep.subr.mxu0 0.0
  %120 = vmatpush1.msra.mxu0 0.0
  %121 = vmatprep.subr.mxu0 0.0
  %122 = vmatpush1.msra.mxu0 0.0
  %123 = vmatprep.subr.mxu0 0.0
  %124 = vmatpush1.msra.mxu0 0.0
  %125 = vmatprep.subr.mxu0 0.0
  %126 = vmatpush1.msra.mxu0 0.0
  %127 = vmatprep.subr.mxu0 0.0
  %128 = vmatpush1.msra.mxu0 0.0
  %129 = vmatprep.subr.mxu0 0.0
  %130 = vmatpush1.msra.mxu0 0.0
  %131 = vmatprep.subr.mxu0 0.0
  %132 = vmatpush1.msra.mxu0 0.0
  %133 = vmatprep.subr.mxu0 0.0
  %134 = vmatpush1.msra.mxu0 %v71
  %135 = vmatprep.subr.mxu0 0.0
  %136 = vmatpush1.msra.mxu0 %v70
  %137 = vmatprep.subr.mxu0 0.0
  %138 = vmatpush1.msra.mxu0 %v69
  %139 = vmatprep.subr.mxu0 0.0
  %140 = vmatpush1.msra.mxu0 %v68
  %141 = vmatprep.subr.mxu0 0.0
  %142 = vmatpush1.msra.mxu0 %v67
  %143 = vmatprep.subr.mxu0 0.0
  %144 = vmatpush1.msra.mxu0 %v66
  %145 = vmatprep.subr.mxu0 0.0
  %146 = vmatpush1.msra.mxu0 %v65
  %147 = vmatprep.subr.mxu0 0.0
  %148 = vmatpush1.msra.mxu0 %v64
  %149 = vmatprep.subr.mxu0 0.0
  %150 = vmatpush2.msra.mxu0 0.0
  %151 = vmatprep.subr.mxu0 0.0
  %152 = vmatpush2.msra.mxu0 0.0
  %153 = vmatprep.subr.mxu0 0.0
  %154 = vmatpush2.msra.mxu0 0.0
  %155 = vmatprep.subr.mxu0 0.0
  %156 = vmatpush2.msra.mxu0 0.0
  %157 = vmatprep.subr.mxu0 0.0
  %158 = vmatpush2.msra.mxu0 0.0
  %159 = vmatprep.subr.mxu0 0.0
  %160 = vmatpush2.msra.mxu0 0.0
  %161 = vmatprep.subr.mxu0 0.0
  %162 = vmatpush2.msra.mxu0 0.0
  %163 = vmatprep.subr.mxu0 0.0
  %164 = vmatpush2.msra.mxu0 0.0
  %165 = vmatprep.subr.mxu0 0.0
  %166 = vmatpush2.msra.mxu0 0.0
  %167 = vmatprep.subr.mxu0 0.0
  %168 = vmatpush2.msra.mxu0 0.0
  %169 = vmatprep.subr.mxu0 0.0
  %170 = vmatpush2.msra.mxu0 0.0
  %171 = vmatprep.subr.mxu0 0.0
  %172 = vmatpush2.msra.mxu0 0.0
  %173 = vmatprep.subr.mxu0 0.0
  %174 = vmatpush2.msra.mxu0 0.0
  %175 = vmatprep.subr.mxu0 0.0
  %176 = vmatpush2.msra.mxu0 0.0
  %177 = vmatprep.subr.mxu0 0.0
  %178 = vmatpush2.msra.mxu0 0.0
  %179 = vmatprep.subr.mxu0 0.0
  %180 = vmatpush2.msra.mxu0 0.0
  %181 = vmatprep.mubr.f32.mxu0 0.0
  %182 = vmatmul.mubr.f32.gmra.mxu0 %v115
  %v183 = vpop.f32.mrf.mxu0
  %v184 = vadd.f32 0.0, %v183
  %v185 = vpop.f32.mrf.mxu0
  %186 = vdwg.mxu0
  %v187 = vmul.f32 %v184, 0.001953125
  %vm188 = vcmask 31744
  %v190 = vsel %vm188, %v187, 0
  %vm192 = vcmask 1043456
  %v194 = vsel %vm192, %v72, 0
  %196 = vmatprep.subr.mxu0 0.0
  %197 = vmatpush1.msra.mxu0 0.0
  %198 = vmatprep.subr.mxu0 0.0
  %199 = vmatpush1.msra.mxu0 0.0
  %200 = vmatprep.subr.mxu0 0.0
  %201 = vmatpush1.msra.mxu0 0.0
  %202 = vmatprep.subr.mxu0 0.0
  %203 = vmatpush1.msra.mxu0 0.0
  %204 = vmatprep.subr.mxu0 0.0
  %205 = vmatpush1.msra.mxu0 0.0
  %206 = vmatprep.subr.mxu0 0.0
  %207 = vmatpush1.msra.mxu0 0.0
  %208 = vmatprep.subr.mxu0 0.0
  %209 = vmatpush1.msra.mxu0 0.0
  %210 = vmatprep.subr.mxu0 0.0
  %211 = vmatpush1.msra.mxu0 0.0
  %212 = vmatprep.subr.mxu0 0.0
  %213 = vmatpush1.msra.mxu0 0.0
  %214 = vmatprep.subr.mxu0 0.0
  %215 = vmatpush1.msra.mxu0 0.0
  %216 = vmatprep.subr.mxu0 0.0
  %217 = vmatpush1.msra.mxu0 0.0
  %218 = vmatprep.subr.mxu0 0.0
  %219 = vmatpush1.msra.mxu0 0.0
  %220 = vmatprep.subr.mxu0 0.0
  %221 = vmatpush1.msra.mxu0 0.0
  %222 = vmatprep.subr.mxu0 0.0
  %223 = vmatpush1.msra.mxu0 0.0
  %224 = vmatprep.subr.mxu0 0.0
  %225 = vmatpush1.msra.mxu0 0.0
  %226 = vmatprep.subr.mxu0 0.0
  %227 = vmatpush1.msra.mxu0 %v194
  %228 = vmatprep.subr.mxu0 0.0
  %229 = vmatpush2.msra.mxu0 0.0
  %230 = vmatprep.subr.mxu0 0.0
  %231 = vmatpush2.msra.mxu0 0.0
  %232 = vmatprep.subr.mxu0 0.0
  %233 = vmatpush2.msra.mxu0 0.0
  %234 = vmatprep.subr.mxu0 0.0
  %235 = vmatpush2.msra.mxu0 0.0
  %236 = vmatprep.subr.mxu0 0.0
  %237 = vmatpush2.msra.mxu0 0.0
  %238 = vmatprep.subr.mxu0 0.0
  %239 = vmatpush2.msra.mxu0 0.0
  %240 = vmatprep.subr.mxu0 0.0
  %241 = vmatpush2.msra.mxu0 0.0
  %242 = vmatprep.subr.mxu0 0.0
  %243 = vmatpush2.msra.mxu0 0.0
  %244 = vmatprep.subr.mxu0 0.0
  %245 = vmatpush2.msra.mxu0 0.0
  %246 = vmatprep.subr.mxu0 0.0
  %247 = vmatpush2.msra.mxu0 0.0
  %248 = vmatprep.subr.mxu0 0.0
  %249 = vmatpush2.msra.mxu0 0.0
  %250 = vmatprep.subr.mxu0 0.0
  %251 = vmatpush2.msra.mxu0 0.0
  %252 = vmatprep.subr.mxu0 0.0
  %253 = vmatpush2.msra.mxu0 0.0
  %254 = vmatprep.subr.mxu0 0.0
  %255 = vmatpush2.msra.mxu0 0.0
  %256 = vmatprep.subr.mxu0 0.0
  %257 = vmatpush2.msra.mxu0 0.0
  %258 = vmatprep.subr.mxu0 0.0
  %259 = vmatpush2.msra.mxu0 0.0
  %260 = vmatprep.mubr.f32.mxu0 0.0
  %261 = vmatmul.mubr.f32.gmra.mxu0 %v190
  %v262 = vpop.f32.mrf.mxu0
  %v263 = vadd.f32 0.0, %v262
  %v264 = vpop.f32.mrf.mxu0
  %265 = vdwg.mxu0
  %v266 = vlaneseq
  %v267 = vshrl.u32 %v266, 7
  %v268 = vsub.s32 0, %v267
  %v269 = vrot.slane %v263, %v268
  %v270 = vsub.f32 %v58, %v269
  %v271 = vsub.f32 %v59, %v269
  %v272 = vsub.f32 %v60, %v269
  %v273 = vsub.f32 %v61, %v269
  %v274 = vmul.f32 %v270, %v270
  %v275 = vmul.f32 %v271, %v271
  %v276 = vmul.f32 %v272, %v272
  %v277 = vmul.f32 %v273, %v273
  %v278 = vsel %vm100, %v274, 0.0
  %v279 = vsel %vm100, %v275, 0.0
  %v280 = vadd.f32 %v278, %v279
  %v281 = vsel %vm100, %v276, 0.0
  %v282 = vadd.f32 %v280, %v281
  %v283 = vsel %vm100, %v277, 0.0
  %v284 = vadd.f32 %v282, %v283
  %v285 = vrot.slane %v284, 4
  %v286 = vadd.f32 %v284, %v285
  %v287 = vrot.slane %v286, 2
  %v288 = vadd.f32 %v286, %v287
  %v289 = vrot.slane %v288, 1
  %v290 = vadd.f32 %v288, %v289
  %v292 = vsel %vm100, %v290, 0
  %294 = vmatprep.subr.mxu0 0.0
  %295 = vmatpush1.msra.mxu0 0.0
  %296 = vmatprep.subr.mxu0 0.0
  %297 = vmatpush1.msra.mxu0 0.0
  %298 = vmatprep.subr.mxu0 0.0
  %299 = vmatpush1.msra.mxu0 0.0
  %300 = vmatprep.subr.mxu0 0.0
  %301 = vmatpush1.msra.mxu0 0.0
  %302 = vmatprep.subr.mxu0 0.0
  %303 = vmatpush1.msra.mxu0 0.0
  %304 = vmatprep.subr.mxu0 0.0
  %305 = vmatpush1.msra.mxu0 0.0
  %306 = vmatprep.subr.mxu0 0.0
  %307 = vmatpush1.msra.mxu0 0.0
  %308 = vmatprep.subr.mxu0 0.0
  %309 = vmatpush1.msra.mxu0 0.0
  %310 = vmatprep.subr.mxu0 0.0
  %311 = vmatpush1.msra.mxu0 %v71
  %312 = vmatprep.subr.mxu0 0.0
  %313 = vmatpush1.msra.mxu0 %v70
  %314 = vmatprep.subr.mxu0 0.0
  %315 = vmatpush1.msra.mxu0 %v69
  %316 = vmatprep.subr.mxu0 0.0
  %317 = vmatpush1.msra.mxu0 %v68
  %318 = vmatprep.subr.mxu0 0.0
  %319 = vmatpush1.msra.mxu0 %v67
  %320 = vmatprep.subr.mxu0 0.0
  %321 = vmatpush1.msra.mxu0 %v66
  %322 = vmatprep.subr.mxu0 0.0
  %323 = vmatpush1.msra.mxu0 %v65
  %324 = vmatprep.subr.mxu0 0.0
  %325 = vmatpush1.msra.mxu0 %v64
  %326 = vmatprep.subr.mxu0 0.0
  %327 = vmatpush2.msra.mxu0 0.0
  %328 = vmatprep.subr.mxu0 0.0
  %329 = vmatpush2.msra.mxu0 0.0
  %330 = vmatprep.subr.mxu0 0.0
  %331 = vmatpush2.msra.mxu0 0.0
  %332 = vmatprep.subr.mxu0 0.0
  %333 = vmatpush2.msra.mxu0 0.0
  %334 = vmatprep.subr.mxu0 0.0
  %335 = vmatpush2.msra.mxu0 0.0
  %336 = vmatprep.subr.mxu0 0.0
  %337 = vmatpush2.msra.mxu0 0.0
  %338 = vmatprep.subr.mxu0 0.0
  %339 = vmatpush2.msra.mxu0 0.0
  %340 = vmatprep.subr.mxu0 0.0
  %341 = vmatpush2.msra.mxu0 0.0
  %342 = vmatprep.subr.mxu0 0.0
  %343 = vmatpush2.msra.mxu0 0.0
  %344 = vmatprep.subr.mxu0 0.0
  %345 = vmatpush2.msra.mxu0 0.0
  %346 = vmatprep.subr.mxu0 0.0
  %347 = vmatpush2.msra.mxu0 0.0
  %348 = vmatprep.subr.mxu0 0.0
  %349 = vmatpush2.msra.mxu0 0.0
  %350 = vmatprep.subr.mxu0 0.0
  %351 = vmatpush2.msra.mxu0 0.0
  %352 = vmatprep.subr.mxu0 0.0
  %353 = vmatpush2.msra.mxu0 0.0
  %354 = vmatprep.subr.mxu0 0.0
  %355 = vmatpush2.msra.mxu0 0.0
  %356 = vmatprep.subr.mxu0 0.0
  %357 = vmatpush2.msra.mxu0 0.0
  %358 = vmatprep.mubr.f32.mxu0 0.0
  %359 = vmatmul.mubr.f32.gmra.mxu0 %v292
  %v360 = vpop.f32.mrf.mxu0
  %v361 = vadd.f32 0.0, %v360
  %v362 = vpop.f32.mrf.mxu0
  %363 = vdwg.mxu0
  %v364 = vmul.f32 %v361, 0.001953125
  %v365 = vadd.f32 %v364, 1e-05
  %v366 = vrsqrt.pop %v365
  %v367 = vmul.f32 %v62, %v366
  %v369 = vsel %vm188, %v367, 0
  %371 = vmatprep.subr.mxu0 0.0
  %372 = vmatpush1.msra.mxu0 0.0
  %373 = vmatprep.subr.mxu0 0.0
  %374 = vmatpush1.msra.mxu0 0.0
  %375 = vmatprep.subr.mxu0 0.0
  %376 = vmatpush1.msra.mxu0 0.0
  %377 = vmatprep.subr.mxu0 0.0
  %378 = vmatpush1.msra.mxu0 0.0
  %379 = vmatprep.subr.mxu0 0.0
  %380 = vmatpush1.msra.mxu0 0.0
  %381 = vmatprep.subr.mxu0 0.0
  %382 = vmatpush1.msra.mxu0 0.0
  %383 = vmatprep.subr.mxu0 0.0
  %384 = vmatpush1.msra.mxu0 0.0
  %385 = vmatprep.subr.mxu0 0.0
  %386 = vmatpush1.msra.mxu0 0.0
  %387 = vmatprep.subr.mxu0 0.0
  %388 = vmatpush1.msra.mxu0 0.0
  %389 = vmatprep.subr.mxu0 0.0
  %390 = vmatpush1.msra.mxu0 0.0
  %391 = vmatprep.subr.mxu0 0.0
  %392 = vmatpush1.msra.mxu0 0.0
  %393 = vmatprep.subr.mxu0 0.0
  %394 = vmatpush1.msra.mxu0 0.0
  %395 = vmatprep.subr.mxu0 0.0
  %396 = vmatpush1.msra.mxu0 0.0
  %397 = vmatprep.subr.mxu0 0.0
  %398 = vmatpush1.msra.mxu0 0.0
  %399 = vmatprep.subr.mxu0 0.0
  %400 = vmatpush1.msra.mxu0 0.0
  %401 = vmatprep.subr.mxu0 0.0
  %402 = vmatpush1.msra.mxu0 %v194
  %403 = vmatprep.subr.mxu0 0.0
  %404 = vmatpush2.msra.mxu0 0.0
  %405 = vmatprep.subr.mxu0 0.0
  %406 = vmatpush2.msra.mxu0 0.0
  %407 = vmatprep.subr.mxu0 0.0
  %408 = vmatpush2.msra.mxu0 0.0
  %409 = vmatprep.subr.mxu0 0.0
  %410 = vmatpush2.msra.mxu0 0.0
  %411 = vmatprep.subr.mxu0 0.0
  %412 = vmatpush2.msra.mxu0 0.0
  %413 = vmatprep.subr.mxu0 0.0
  %414 = vmatpush2.msra.mxu0 0.0
  %415 = vmatprep.subr.mxu0 0.0
  %416 = vmatpush2.msra.mxu0 0.0
  %417 = vmatprep.subr.mxu0 0.0
  %418 = vmatpush2.msra.mxu0 0.0
  %419 = vmatprep.subr.mxu0 0.0
  %420 = vmatpush2.msra.mxu0 0.0
  %421 = vmatprep.subr.mxu0 0.0
  %422 = vmatpush2.msra.mxu0 0.0
  %423 = vmatprep.subr.mxu0 0.0
  %424 = vmatpush2.msra.mxu0 0.0
  %425 = vmatprep.subr.mxu0 0.0
  %426 = vmatpush2.msra.mxu0 0.0
  %427 = vmatprep.subr.mxu0 0.0
  %428 = vmatpush2.msra.mxu0 0.0
  %429 = vmatprep.subr.mxu0 0.0
  %430 = vmatpush2.msra.mxu0 0.0
  %431 = vmatprep.subr.mxu0 0.0
  %432 = vmatpush2.msra.mxu0 0.0
  %433 = vmatprep.subr.mxu0 0.0
  %434 = vmatpush2.msra.mxu0 0.0
  %435 = vmatprep.mubr.f32.mxu0 0.0
  %436 = vmatmul.mubr.f32.gmra.mxu0 %v369
  %v437 = vpop.f32.mrf.mxu0
  %v438 = vadd.f32 0.0, %v437
  %v439 = vpop.f32.mrf.mxu0
  %440 = vdwg.mxu0
  %v442 = vsel %vm188, %v63, 0
  %444 = vmatprep.subr.mxu0 0.0
  %445 = vmatpush1.msra.mxu0 0.0
  %446 = vmatprep.subr.mxu0 0.0
  %447 = vmatpush1.msra.mxu0 0.0
  %448 = vmatprep.subr.mxu0 0.0
  %449 = vmatpush1.msra.mxu0 0.0
  %450 = vmatprep.subr.mxu0 0.0
  %451 = vmatpush1.msra.mxu0 0.0
  %452 = vmatprep.subr.mxu0 0.0
  %453 = vmatpush1.msra.mxu0 0.0
  %454 = vmatprep.subr.mxu0 0.0
  %455 = vmatpush1.msra.mxu0 0.0
  %456 = vmatprep.subr.mxu0 0.0
  %457 = vmatpush1.msra.mxu0 0.0
  %458 = vmatprep.subr.mxu0 0.0
  %459 = vmatpush1.msra.mxu0 0.0
  %460 = vmatprep.subr.mxu0 0.0
  %461 = vmatpush1.msra.mxu0 0.0
  %462 = vmatprep.subr.mxu0 0.0
  %463 = vmatpush1.msra.mxu0 0.0
  %464 = vmatprep.subr.mxu0 0.0
  %465 = vmatpush1.msra.mxu0 0.0
  %466 = vmatprep.subr.mxu0 0.0
  %467 = vmatpush1.msra.mxu0 0.0
  %468 = vmatprep.subr.mxu0 0.0
  %469 = vmatpush1.msra.mxu0 0.0
  %470 = vmatprep.subr.mxu0 0.0
  %471 = vmatpush1.msra.mxu0 0.0
  %472 = vmatprep.subr.mxu0 0.0
  %473 = vmatpush1.msra.mxu0 0.0
  %474 = vmatprep.subr.mxu0 0.0
  %475 = vmatpush1.msra.mxu0 %v194
  %476 = vmatprep.subr.mxu0 0.0
  %477 = vmatpush2.msra.mxu0 0.0
  %478 = vmatprep.subr.mxu0 0.0
  %479 = vmatpush2.msra.mxu0 0.0
  %480 = vmatprep.subr.mxu0 0.0
  %481 = vmatpush2.msra.mxu0 0.0
  %482 = vmatprep.subr.mxu0 0.0
  %483 = vmatpush2.msra.mxu0 0.0
  %484 = vmatprep.subr.mxu0 0.0
  %485 = vmatpush2.msra.mxu0 0.0
  %486 = vmatprep.subr.mxu0 0.0
  %487 = vmatpush2.msra.mxu0 0.0
  %488 = vmatprep.subr.mxu0 0.0
  %489 = vmatpush2.msra.mxu0 0.0
  %490 = vmatprep.subr.mxu0 0.0
  %491 = vmatpush2.msra.mxu0 0.0
  %492 = vmatprep.subr.mxu0 0.0
  %493 = vmatpush2.msra.mxu0 0.0
  %494 = vmatprep.subr.mxu0 0.0
  %495 = vmatpush2.msra.mxu0 0.0
  %496 = vmatprep.subr.mxu0 0.0
  %497 = vmatpush2.msra.mxu0 0.0
  %498 = vmatprep.subr.mxu0 0.0
  %499 = vmatpush2.msra.mxu0 0.0
  %500 = vmatprep.subr.mxu0 0.0
  %501 = vmatpush2.msra.mxu0 0.0
  %502 = vmatprep.subr.mxu0 0.0
  %503 = vmatpush2.msra.mxu0 0.0
  %504 = vmatprep.subr.mxu0 0.0
  %505 = vmatpush2.msra.mxu0 0.0
  %506 = vmatprep.subr.mxu0 0.0
  %507 = vmatpush2.msra.mxu0 0.0
  %508 = vmatprep.mubr.f32.mxu0 0.0
  %509 = vmatmul.mubr.f32.gmra.mxu0 %v442
  %v510 = vpop.f32.mrf.mxu0
  %v511 = vadd.f32 0.0, %v510
  %v512 = vpop.f32.mrf.mxu0
  %513 = vdwg.mxu0
  %v514 = vlaneseq
  %v515 = vshrl.u32 %v514, 7
  %v516 = vsub.s32 0, %v515
  %v517 = vrot.slane %v438, %v516
  %v518 = vmul.f32 %v270, %v517
  %v519 = vmul.f32 %v271, %v517
  %v520 = vmul.f32 %v272, %v517
  %v521 = vmul.f32 %v273, %v517
  %v522 = vlaneseq
  %v523 = vshrl.u32 %v522, 7
  %v524 = vsub.s32 0, %v523
  %v525 = vrot.slane %v511, %v524
  %v526 = vadd.f32 %v518, %v525
  %v527 = vadd.f32 %v519, %v525
  %v528 = vadd.f32 %v520, %v525
  %v529 = vadd.f32 %v521, %v525
  %v530 = vmax.f32 %v526, 0.0
  %v531 = vmax.f32 %v527, 0.0
  %v532 = vmax.f32 %v528, 0.0
  %v533 = vmax.f32 %v529, 0.0
  %v535 = vsel %vm100, %v530, 0
  %v538 = vsel %vm100, %v531, 0
  %v541 = vsel %vm100, %v532, 0
  %v544 = vsel %vm100, %v533, 0
  %546 = vmatprep.subr.mxu0 0.0
  %547 = vmatpush1.msra.mxu0 0.0
  %548 = vmatprep.subr.mxu0 0.0
  %549 = vmatpush1.msra.mxu0 0.0
  %550 = vmatprep.subr.mxu0 0.0
  %551 = vmatpush1.msra.mxu0 0.0
  %552 = vmatprep.subr.mxu0 0.0
  %553 = vmatpush1.msra.mxu0 0.0
  %554 = vmatprep.subr.mxu0 0.0
  %555 = vmatpush1.msra.mxu0 0.0
  %556 = vmatprep.subr.mxu0 0.0
  %557 = vmatpush1.msra.mxu0 0.0
  %558 = vmatprep.subr.mxu0 0.0
  %559 = vmatpush1.msra.mxu0 0.0
  %560 = vmatprep.subr.mxu0 0.0
  %561 = vmatpush1.msra.mxu0 0.0
  %562 = vmatprep.subr.mxu0 0.0
  %563 = vmatpush1.msra.mxu0 %v80
  %564 = vmatprep.subr.mxu0 0.0
  %565 = vmatpush1.msra.mxu0 %v79
  %566 = vmatprep.subr.mxu0 0.0
  %567 = vmatpush1.msra.mxu0 %v78
  %568 = vmatprep.subr.mxu0 0.0
  %569 = vmatpush1.msra.mxu0 %v77
  %570 = vmatprep.subr.mxu0 0.0
  %571 = vmatpush1.msra.mxu0 %v76
  %572 = vmatprep.subr.mxu0 0.0
  %573 = vmatpush1.msra.mxu0 %v75
  %574 = vmatprep.subr.mxu0 0.0
  %575 = vmatpush1.msra.mxu0 %v74
  %576 = vmatprep.subr.mxu0 0.0
  %577 = vmatpush1.msra.mxu0 %v73
  %578 = vmatprep.subr.mxu0 0.0
  %579 = vmatpush2.msra.mxu0 0.0
  %580 = vmatprep.subr.mxu0 0.0
  %581 = vmatpush2.msra.mxu0 0.0
  %582 = vmatprep.subr.mxu0 0.0
  %583 = vmatpush2.msra.mxu0 0.0
  %584 = vmatprep.subr.mxu0 0.0
  %585 = vmatpush2.msra.mxu0 0.0
  %586 = vmatprep.subr.mxu0 0.0
  %587 = vmatpush2.msra.mxu0 0.0
  %588 = vmatprep.subr.mxu0 0.0
  %589 = vmatpush2.msra.mxu0 0.0
  %590 = vmatprep.subr.mxu0 0.0
  %591 = vmatpush2.msra.mxu0 0.0
  %592 = vmatprep.subr.mxu0 0.0
  %593 = vmatpush2.msra.mxu0 0.0
  %594 = vmatprep.subr.mxu0 0.0
  %595 = vmatpush2.msra.mxu0 0.0
  %596 = vmatprep.subr.mxu0 0.0
  %597 = vmatpush2.msra.mxu0 0.0
  %598 = vmatprep.subr.mxu0 0.0
  %599 = vmatpush2.msra.mxu0 0.0
  %600 = vmatprep.subr.mxu0 0.0
  %601 = vmatpush2.msra.mxu0 0.0
  %602 = vmatprep.subr.mxu0 0.0
  %603 = vmatpush2.msra.mxu0 0.0
  %604 = vmatprep.subr.mxu0 0.0
  %605 = vmatpush2.msra.mxu0 0.0
  %606 = vmatprep.subr.mxu0 0.0
  %607 = vmatpush2.msra.mxu0 0.0
  %608 = vmatprep.subr.mxu0 0.0
  %609 = vmatpush2.msra.mxu0 0.0
  %610 = vmatprep.mubr.f32.mxu0 0.0
  %611 = vmatmul.mubr.f32.gmra.mxu0 %v535
  %v612 = vpop.f32.mrf.mxu0
  %v613 = vadd.f32 0.0, %v612
  %v614 = vpop.f32.mrf.mxu0
  %615 = vmatprep.mubr.f32.mxu0 0.0
  %616 = vmatmul.mubr.f32.gmra.mxu0 %v538
  %v617 = vpop.f32.mrf.mxu0
  %v618 = vadd.f32 0.0, %v617
  %v619 = vpop.f32.mrf.mxu0
  %620 = vmatprep.mubr.f32.mxu0 0.0
  %621 = vmatmul.mubr.f32.gmra.mxu0 %v541
  %v622 = vpop.f32.mrf.mxu0
  %v623 = vadd.f32 0.0, %v622
  %v624 = vpop.f32.mrf.mxu0
  %625 = vmatprep.mubr.f32.mxu0 0.0
  %626 = vmatmul.mubr.f32.gmra.mxu0 %v544
  %v627 = vpop.f32.mrf.mxu0
  %v628 = vadd.f32 0.0, %v627
  %v629 = vpop.f32.mrf.mxu0
  %630 = vdwg.mxu0
  %631 = vmatprep.subr.mxu0 0.0
  %632 = vmatpush1.msra.mxu0 0.0
  %633 = vmatprep.subr.mxu0 0.0
  %634 = vmatpush1.msra.mxu0 0.0
  %635 = vmatprep.subr.mxu0 0.0
  %636 = vmatpush1.msra.mxu0 0.0
  %637 = vmatprep.subr.mxu0 0.0
  %638 = vmatpush1.msra.mxu0 0.0
  %639 = vmatprep.subr.mxu0 0.0
  %640 = vmatpush1.msra.mxu0 0.0
  %641 = vmatprep.subr.mxu0 0.0
  %642 = vmatpush1.msra.mxu0 0.0
  %643 = vmatprep.subr.mxu0 0.0
  %644 = vmatpush1.msra.mxu0 0.0
  %645 = vmatprep.subr.mxu0 0.0
  %646 = vmatpush1.msra.mxu0 0.0
  %647 = vmatprep.subr.mxu0 0.0
  %648 = vmatpush1.msra.mxu0 %v89
  %649 = vmatprep.subr.mxu0 0.0
  %650 = vmatpush1.msra.mxu0 %v88
  %651 = vmatprep.subr.mxu0 0.0
  %652 = vmatpush1.msra.mxu0 %v87
  %653 = vmatprep.subr.mxu0 0.0
  %654 = vmatpush1.msra.mxu0 %v86
  %655 = vmatprep.subr.mxu0 0.0
  %656 = vmatpush1.msra.mxu0 %v85
  %657 = vmatprep.subr.mxu0 0.0
  %658 = vmatpush1.msra.mxu0 %v84
  %659 = vmatprep.subr.mxu0 0.0
  %660 = vmatpush1.msra.mxu0 %v83
  %661 = vmatprep.subr.mxu0 0.0
  %662 = vmatpush1.msra.mxu0 %v82
  %663 = vmatprep.subr.mxu0 0.0
  %664 = vmatpush2.msra.mxu0 0.0
  %665 = vmatprep.subr.mxu0 0.0
  %666 = vmatpush2.msra.mxu0 0.0
  %667 = vmatprep.subr.mxu0 0.0
  %668 = vmatpush2.msra.mxu0 0.0
  %669 = vmatprep.subr.mxu0 0.0
  %670 = vmatpush2.msra.mxu0 0.0
  %671 = vmatprep.subr.mxu0 0.0
  %672 = vmatpush2.msra.mxu0 0.0
  %673 = vmatprep.subr.mxu0 0.0
  %674 = vmatpush2.msra.mxu0 0.0
  %675 = vmatprep.subr.mxu0 0.0
  %676 = vmatpush2.msra.mxu0 0.0
  %677 = vmatprep.subr.mxu0 0.0
  %678 = vmatpush2.msra.mxu0 0.0
  %679 = vmatprep.subr.mxu0 0.0
  %680 = vmatpush2.msra.mxu0 0.0
  %681 = vmatprep.subr.mxu0 0.0
  %682 = vmatpush2.msra.mxu0 0.0
  %683 = vmatprep.subr.mxu0 0.0
  %684 = vmatpush2.msra.mxu0 0.0
  %685 = vmatprep.subr.mxu0 0.0
  %686 = vmatpush2.msra.mxu0 0.0
  %687 = vmatprep.subr.mxu0 0.0
  %688 = vmatpush2.msra.mxu0 0.0
  %689 = vmatprep.subr.mxu0 0.0
  %690 = vmatpush2.msra.mxu0 0.0
  %691 = vmatprep.subr.mxu0 0.0
  %692 = vmatpush2.msra.mxu0 0.0
  %693 = vmatprep.subr.mxu0 0.0
  %694 = vmatpush2.msra.mxu0 0.0
  %695 = vmatprep.mubr.f32.mxu0 0.0
  %696 = vmatmul.mubr.f32.gmra.mxu0 %v535
  %v697 = vpop.f32.mrf.mxu0
  %v698 = vadd.f32 0.0, %v697
  %v699 = vpop.f32.mrf.mxu0
  %700 = vmatprep.mubr.f32.mxu0 0.0
  %701 = vmatmul.mubr.f32.gmra.mxu0 %v538
  %v702 = vpop.f32.mrf.mxu0
  %v703 = vadd.f32 0.0, %v702
  %v704 = vpop.f32.mrf.mxu0
  %705 = vmatprep.mubr.f32.mxu0 0.0
  %706 = vmatmul.mubr.f32.gmra.mxu0 %v541
  %v707 = vpop.f32.mrf.mxu0
  %v708 = vadd.f32 0.0, %v707
  %v709 = vpop.f32.mrf.mxu0
  %710 = vmatprep.mubr.f32.mxu0 0.0
  %711 = vmatmul.mubr.f32.gmra.mxu0 %v544
  %v712 = vpop.f32.mrf.mxu0
  %v713 = vadd.f32 0.0, %v712
  %v714 = vpop.f32.mrf.mxu0
  %715 = vdwg.mxu0
  %716 = vmatprep.subr.mxu0 0.0
  %717 = vmatpush1.msra.mxu0 0.0
  %718 = vmatprep.subr.mxu0 0.0
  %719 = vmatpush1.msra.mxu0 0.0
  %720 = vmatprep.subr.mxu0 0.0
  %721 = vmatpush1.msra.mxu0 0.0
  %722 = vmatprep.subr.mxu0 0.0
  %723 = vmatpush1.msra.mxu0 0.0
  %724 = vmatprep.subr.mxu0 0.0
  %725 = vmatpush1.msra.mxu0 0.0
  %726 = vmatprep.subr.mxu0 0.0
  %727 = vmatpush1.msra.mxu0 0.0
  %728 = vmatprep.subr.mxu0 0.0
  %729 = vmatpush1.msra.mxu0 0.0
  %730 = vmatprep.subr.mxu0 0.0
  %731 = vmatpush1.msra.mxu0 0.0
  %732 = vmatprep.subr.mxu0 0.0
  %733 = vmatpush1.msra.mxu0 %v98
  %734 = vmatprep.subr.mxu0 0.0
  %735 = vmatpush1.msra.mxu0 %v97
  %736 = vmatprep.subr.mxu0 0.0
  %737 = vmatpush1.msra.mxu0 %v96
  %738 = vmatprep.subr.mxu0 0.0
  %739 = vmatpush1.msra.mxu0 %v95
  %740 = vmatprep.subr.mxu0 0.0
  %741 = vmatpush1.msra.mxu0 %v94
  %742 = vmatprep.subr.mxu0 0.0
  %743 = vmatpush1.msra.mxu0 %v93
  %744 = vmatprep.subr.mxu0 0.0
  %745 = vmatpush1.msra.mxu0 %v92
  %746 = vmatprep.subr.mxu0 0.0
  %747 = vmatpush1.msra.mxu0 %v91
  %748 = vmatprep.subr.mxu0 0.0
  %749 = vmatpush2.msra.mxu0 0.0
  %750 = vmatprep.subr.mxu0 0.0
  %751 = vmatpush2.msra.mxu0 0.0
  %752 = vmatprep.subr.mxu0 0.0
  %753 = vmatpush2.msra.mxu0 0.0
  %754 = vmatprep.subr.mxu0 0.0
  %755 = vmatpush2.msra.mxu0 0.0
  %756 = vmatprep.subr.mxu0 0.0
  %757 = vmatpush2.msra.mxu0 0.0
  %758 = vmatprep.subr.mxu0 0.0
  %759 = vmatpush2.msra.mxu0 0.0
  %760 = vmatprep.subr.mxu0 0.0
  %761 = vmatpush2.msra.mxu0 0.0
  %762 = vmatprep.subr.mxu0 0.0
  %763 = vmatpush2.msra.mxu0 0.0
  %764 = vmatprep.subr.mxu0 0.0
  %765 = vmatpush2.msra.mxu0 0.0
  %766 = vmatprep.subr.mxu0 0.0
  %767 = vmatpush2.msra.mxu0 0.0
  %768 = vmatprep.subr.mxu0 0.0
  %769 = vmatpush2.msra.mxu0 0.0
  %770 = vmatprep.subr.mxu0 0.0
  %771 = vmatpush2.msra.mxu0 0.0
  %772 = vmatprep.subr.mxu0 0.0
  %773 = vmatpush2.msra.mxu0 0.0
  %774 = vmatprep.subr.mxu0 0.0
  %775 = vmatpush2.msra.mxu0 0.0
  %776 = vmatprep.subr.mxu0 0.0
  %777 = vmatpush2.msra.mxu0 0.0
  %778 = vmatprep.subr.mxu0 0.0
  %779 = vmatpush2.msra.mxu0 0.0
  %780 = vmatprep.mubr.f32.mxu0 0.0
  %781 = vmatmul.mubr.f32.gmra.mxu0 %v535
  %v782 = vpop.f32.mrf.mxu0
  %v783 = vadd.f32 0.0, %v782
  %v784 = vpop.f32.mrf.mxu0
  %785 = vmatprep.mubr.f32.mxu0 0.0
  %786 = vmatmul.mubr.f32.gmra.mxu0 %v538
  %v787 = vpop.f32.mrf.mxu0
  %v788 = vadd.f32 0.0, %v787
  %v789 = vpop.f32.mrf.mxu0
  %790 = vmatprep.mubr.f32.mxu0 0.0
  %791 = vmatmul.mubr.f32.gmra.mxu0 %v541
  %v792 = vpop.f32.mrf.mxu0
  %v793 = vadd.f32 0.0, %v792
  %v794 = vpop.f32.mrf.mxu0
  %795 = vmatprep.mubr.f32.mxu0 0.0
  %796 = vmatmul.mubr.f32.gmra.mxu0 %v544
  %v797 = vpop.f32.mrf.mxu0
  %v798 = vadd.f32 0.0, %v797
  %v799 = vpop.f32.mrf.mxu0
  %800 = vdwg.mxu0
  %v802 = vlaneseq
  %v803 = vshrl.u32 %v802, 7
  %v804 = vsub.s32 0, %v803
  %v805 = vrot.slane %v99, %v804
  %v807 = vadd.f32 %v805, %v698
  %v808 = vadd.f32 %v805, %v703
  %v809 = vadd.f32 %v805, %v708
  %v810 = vadd.f32 %v805, %v713
  %vm811 = vcmask 261120
  %v813 = vsel %vm811, %v50, 0
  %v816 = vsel %vm811, %v51, 0
  %v819 = vsel %vm811, %v52, 0
  %v822 = vsel %vm811, %v53, 0
  %824 = vmatprep.subr.mxu0 0.0
  %825 = vmatpush1.msra.mxu0 0.0
  %826 = vmatprep.subr.mxu0 0.0
  %827 = vmatpush1.msra.mxu0 0.0
  %828 = vmatprep.subr.mxu0 0.0
  %829 = vmatpush1.msra.mxu0 0.0
  %830 = vmatprep.subr.mxu0 0.0
  %831 = vmatpush1.msra.mxu0 0.0
  %832 = vmatprep.subr.mxu0 0.0
  %833 = vmatpush1.msra.mxu0 0.0
  %834 = vmatprep.subr.mxu0 0.0
  %835 = vmatpush1.msra.mxu0 0.0
  %836 = vmatprep.subr.mxu0 0.0
  %837 = vmatpush1.msra.mxu0 0.0
  %838 = vmatprep.subr.mxu0 0.0
  %839 = vmatpush1.msra.mxu0 0.0
  %840 = vmatprep.subr.mxu0 0.0
  %841 = vmatpush1.msra.mxu0 0.0
  %842 = vmatprep.subr.mxu0 0.0
  %843 = vmatpush1.msra.mxu0 0.0
  %844 = vmatprep.subr.mxu0 0.0
  %845 = vmatpush1.msra.mxu0 0.0
  %846 = vmatprep.subr.mxu0 0.0
  %847 = vmatpush1.msra.mxu0 0.0
  %848 = vmatprep.subr.mxu0 0.0
  %849 = vmatpush1.msra.mxu0 %v628
  %850 = vmatprep.subr.mxu0 0.0
  %851 = vmatpush1.msra.mxu0 %v623
  %852 = vmatprep.subr.mxu0 0.0
  %853 = vmatpush1.msra.mxu0 %v618
  %854 = vmatprep.subr.mxu0 0.0
  %855 = vmatpush1.msra.mxu0 %v613
  %856 = vmatprep.subr.mxu0 0.0
  %857 = vmatpush2.msra.mxu0 0.0
  %858 = vmatprep.subr.mxu0 0.0
  %859 = vmatpush2.msra.mxu0 0.0
  %860 = vmatprep.subr.mxu0 0.0
  %861 = vmatpush2.msra.mxu0 0.0
  %862 = vmatprep.subr.mxu0 0.0
  %863 = vmatpush2.msra.mxu0 0.0
  %864 = vmatprep.subr.mxu0 0.0
  %865 = vmatpush2.msra.mxu0 0.0
  %866 = vmatprep.subr.mxu0 0.0
  %867 = vmatpush2.msra.mxu0 0.0
  %868 = vmatprep.subr.mxu0 0.0
  %869 = vmatpush2.msra.mxu0 0.0
  %870 = vmatprep.subr.mxu0 0.0
  %871 = vmatpush2.msra.mxu0 0.0
  %872 = vmatprep.subr.mxu0 0.0
  %873 = vmatpush2.msra.mxu0 0.0
  %874 = vmatprep.subr.mxu0 0.0
  %875 = vmatpush2.msra.mxu0 0.0
  %876 = vmatprep.subr.mxu0 0.0
  %877 = vmatpush2.msra.mxu0 0.0
  %878 = vmatprep.subr.mxu0 0.0
  %879 = vmatpush2.msra.mxu0 0.0
  %880 = vmatprep.subr.mxu0 0.0
  %881 = vmatpush2.msra.mxu0 0.0
  %882 = vmatprep.subr.mxu0 0.0
  %883 = vmatpush2.msra.mxu0 0.0
  %884 = vmatprep.subr.mxu0 0.0
  %885 = vmatpush2.msra.mxu0 0.0
  %886 = vmatprep.subr.mxu0 0.0
  %887 = vmatpush2.msra.mxu0 0.0
  %888 = vmatprep.mubr.f32.mxu0 0.0
  %889 = vmatmul.mubr.f32.gmra.mxu0 %v813
  %v890 = vpop.f32.mrf.mxu0
  %v891 = vadd.f32 0.0, %v890
  %v892 = vpop.f32.mrf.mxu0
  %893 = vmatprep.mubr.f32.mxu0 0.0
  %894 = vmatmul.mubr.f32.gmra.mxu0 %v816
  %v895 = vpop.f32.mrf.mxu0
  %v896 = vadd.f32 0.0, %v895
  %v897 = vpop.f32.mrf.mxu0
  %898 = vmatprep.mubr.f32.mxu0 0.0
  %899 = vmatmul.mubr.f32.gmra.mxu0 %v819
  %v900 = vpop.f32.mrf.mxu0
  %v901 = vadd.f32 0.0, %v900
  %v902 = vpop.f32.mrf.mxu0
  %903 = vmatprep.mubr.f32.mxu0 0.0
  %904 = vmatmul.mubr.f32.gmra.mxu0 %v822
  %v905 = vpop.f32.mrf.mxu0
  %v906 = vadd.f32 0.0, %v905
  %v907 = vpop.f32.mrf.mxu0
  %908 = vdwg.mxu0
  %v909 = vadd.f32 %v807, %v891
  %v910 = vadd.f32 %v808, %v896
  %v911 = vadd.f32 %v809, %v901
  %v912 = vadd.f32 %v810, %v906
  %v914 = vsel %vm811, %v54, 0
  %v917 = vsel %vm811, %v55, 0
  %v920 = vsel %vm811, %v56, 0
  %v923 = vsel %vm811, %v57, 0
  %925 = vmatprep.subr.mxu0 0.0
  %926 = vmatpush1.msra.mxu0 0.0
  %927 = vmatprep.subr.mxu0 0.0
  %928 = vmatpush1.msra.mxu0 0.0
  %929 = vmatprep.subr.mxu0 0.0
  %930 = vmatpush1.msra.mxu0 0.0
  %931 = vmatprep.subr.mxu0 0.0
  %932 = vmatpush1.msra.mxu0 0.0
  %933 = vmatprep.subr.mxu0 0.0
  %934 = vmatpush1.msra.mxu0 0.0
  %935 = vmatprep.subr.mxu0 0.0
  %936 = vmatpush1.msra.mxu0 0.0
  %937 = vmatprep.subr.mxu0 0.0
  %938 = vmatpush1.msra.mxu0 0.0
  %939 = vmatprep.subr.mxu0 0.0
  %940 = vmatpush1.msra.mxu0 0.0
  %941 = vmatprep.subr.mxu0 0.0
  %942 = vmatpush1.msra.mxu0 0.0
  %943 = vmatprep.subr.mxu0 0.0
  %944 = vmatpush1.msra.mxu0 0.0
  %945 = vmatprep.subr.mxu0 0.0
  %946 = vmatpush1.msra.mxu0 0.0
  %947 = vmatprep.subr.mxu0 0.0
  %948 = vmatpush1.msra.mxu0 0.0
  %949 = vmatprep.subr.mxu0 0.0
  %950 = vmatpush1.msra.mxu0 %v798
  %951 = vmatprep.subr.mxu0 0.0
  %952 = vmatpush1.msra.mxu0 %v793
  %953 = vmatprep.subr.mxu0 0.0
  %954 = vmatpush1.msra.mxu0 %v788
  %955 = vmatprep.subr.mxu0 0.0
  %956 = vmatpush1.msra.mxu0 %v783
  %957 = vmatprep.subr.mxu0 0.0
  %958 = vmatpush2.msra.mxu0 0.0
  %959 = vmatprep.subr.mxu0 0.0
  %960 = vmatpush2.msra.mxu0 0.0
  %961 = vmatprep.subr.mxu0 0.0
  %962 = vmatpush2.msra.mxu0 0.0
  %963 = vmatprep.subr.mxu0 0.0
  %964 = vmatpush2.msra.mxu0 0.0
  %965 = vmatprep.subr.mxu0 0.0
  %966 = vmatpush2.msra.mxu0 0.0
  %967 = vmatprep.subr.mxu0 0.0
  %968 = vmatpush2.msra.mxu0 0.0
  %969 = vmatprep.subr.mxu0 0.0
  %970 = vmatpush2.msra.mxu0 0.0
  %971 = vmatprep.subr.mxu0 0.0
  %972 = vmatpush2.msra.mxu0 0.0
  %973 = vmatprep.subr.mxu0 0.0
  %974 = vmatpush2.msra.mxu0 0.0
  %975 = vmatprep.subr.mxu0 0.0
  %976 = vmatpush2.msra.mxu0 0.0
  %977 = vmatprep.subr.mxu0 0.0
  %978 = vmatpush2.msra.mxu0 0.0
  %979 = vmatprep.subr.mxu0 0.0
  %980 = vmatpush2.msra.mxu0 0.0
  %981 = vmatprep.subr.mxu0 0.0
  %982 = vmatpush2.msra.mxu0 0.0
  %983 = vmatprep.subr.mxu0 0.0
  %984 = vmatpush2.msra.mxu0 0.0
  %985 = vmatprep.subr.mxu0 0.0
  %986 = vmatpush2.msra.mxu0 0.0
  %987 = vmatprep.subr.mxu0 0.0
  %988 = vmatpush2.msra.mxu0 0.0
  %989 = vmatprep.mubr.f32.mxu0 0.0
  %990 = vmatmul.mubr.f32.gmra.mxu0 %v914
  %v991 = vpop.f32.mrf.mxu0
  %v992 = vadd.f32 0.0, %v991
  %v993 = vpop.f32.mrf.mxu0
  %994 = vmatprep.mubr.f32.mxu0 0.0
  %995 = vmatmul.mubr.f32.gmra.mxu0 %v917
  %v996 = vpop.f32.mrf.mxu0
  %v997 = vadd.f32 0.0, %v996
  %v998 = vpop.f32.mrf.mxu0
  %999 = vmatprep.mubr.f32.mxu0 0.0
  %1000 = vmatmul.mubr.f32.gmra.mxu0 %v920
  %v1001 = vpop.f32.mrf.mxu0
  %v1002 = vadd.f32 0.0, %v1001
  %v1003 = vpop.f32.mrf.mxu0
  %1004 = vmatprep.mubr.f32.mxu0 0.0
  %1005 = vmatmul.mubr.f32.gmra.mxu0 %v923
  %v1006 = vpop.f32.mrf.mxu0
  %v1007 = vadd.f32 0.0, %v1006
  %v1008 = vpop.f32.mrf.mxu0
  %1009 = vdwg.mxu0
  %v1010 = vadd.f32 %v909, %v992
  %v1011 = vadd.f32 %v910, %v997
  %v1012 = vadd.f32 %v911, %v1002
  %v1013 = vadd.f32 %v912, %v1007
  %v1014 = vld [vmem:[%s9] sm:$0x1]
  %v1015 = vld [vmem:[%s10] sm:$0x1]
  %v1016 = vld [vmem:[%s11] sm:$0xff]
  %v1017 = vld [vmem:[%s11 + $0x8] sm:$0xff]
  %v1018 = vld [vmem:[%s11 + $0x10] sm:$0xff]
  %v1019 = vld [vmem:[%s11 + $0x18] sm:$0xff]
  %v1020 = vld [vmem:[%s11 + $0x20] sm:$0xff]
  %v1021 = vld [vmem:[%s11 + $0x28] sm:$0xff]
  %v1022 = vld [vmem:[%s11 + $0x30] sm:$0xff]
  %v1023 = vld [vmem:[%s11 + $0x38] sm:$0xff]
  %v1024 = vld [vmem:[%s11 + $0x40] sm:$0xff]
  %v1025 = vld [vmem:[%s11 + $0x48] sm:$0xff]
  %v1026 = vld [vmem:[%s11 + $0x50] sm:$0xff]
  %v1027 = vld [vmem:[%s11 + $0x58] sm:$0xff]
  %v1028 = vld [vmem:[%s11 + $0x60] sm:$0xff]
  %v1029 = vld [vmem:[%s11 + $0x68] sm:$0xff]
  %v1030 = vld [vmem:[%s11 + $0x70] sm:$0xff]
  %v1031 = vld [vmem:[%s11 + $0x78] sm:$0xff]
  %v1032 = vld [vmem:[%s12] sm:$0xff]
  %v1033 = vld [vmem:[%s13] sm:$0xff]
  %v1034 = vld [vmem:[%s13 + $0x8] sm:$0xff]
  %v1035 = vld [vmem:[%s13 + $0x10] sm:$0xff]
  %v1036 = vld [vmem:[%s13 + $0x18] sm:$0xff]
  %v1037 = vld [vmem:[%s13 + $0x20] sm:$0xff]
  %v1038 = vld [vmem:[%s13 + $0x28] sm:$0xff]
  %v1039 = vld [vmem:[%s13 + $0x30] sm:$0xff]
  %v1040 = vld [vmem:[%s13 + $0x38] sm:$0xff]
  %v1041 = vld [vmem:[%s13 + $0x40] sm:$0xff]
  %v1042 = vld [vmem:[%s13 + $0x48] sm:$0xff]
  %v1043 = vld [vmem:[%s13 + $0x50] sm:$0xff]
  %v1044 = vld [vmem:[%s13 + $0x58] sm:$0xff]
  %v1045 = vld [vmem:[%s13 + $0x60] sm:$0xff]
  %v1046 = vld [vmem:[%s13 + $0x68] sm:$0xff]
  %v1047 = vld [vmem:[%s13 + $0x70] sm:$0xff]
  %v1048 = vld [vmem:[%s13 + $0x78] sm:$0xff]
  %s1049 = scalar_lea.vmem %s13, 128
  %v1050 = vld [vmem:[%s1049] sm:$0xff]
  %v1051 = vld [vmem:[%s1049 + $0x8] sm:$0xff]
  %v1052 = vld [vmem:[%s1049 + $0x10] sm:$0xff]
  %v1053 = vld [vmem:[%s1049 + $0x18] sm:$0xff]
  %v1054 = vld [vmem:[%s1049 + $0x20] sm:$0xff]
  %v1055 = vld [vmem:[%s1049 + $0x28] sm:$0xff]
  %v1056 = vld [vmem:[%s1049 + $0x30] sm:$0xff]
  %v1057 = vld [vmem:[%s1049 + $0x38] sm:$0xff]
  %v1058 = vld [vmem:[%s1049 + $0x40] sm:$0xff]
  %v1059 = vld [vmem:[%s1049 + $0x48] sm:$0xff]
  %v1060 = vld [vmem:[%s1049 + $0x50] sm:$0xff]
  %v1061 = vld [vmem:[%s1049 + $0x58] sm:$0xff]
  %v1062 = vld [vmem:[%s1049 + $0x60] sm:$0xff]
  %v1063 = vld [vmem:[%s1049 + $0x68] sm:$0xff]
  %v1064 = vld [vmem:[%s1049 + $0x70] sm:$0xff]
  %v1065 = vld [vmem:[%s1049 + $0x78] sm:$0xff]
  %s1066 = scalar_lea.vmem %s13, 256
  %v1067 = vld [vmem:[%s1066] sm:$0xff]
  %v1068 = vld [vmem:[%s1066 + $0x8] sm:$0xff]
  %v1069 = vld [vmem:[%s1066 + $0x10] sm:$0xff]
  %v1070 = vld [vmem:[%s1066 + $0x18] sm:$0xff]
  %v1071 = vld [vmem:[%s1066 + $0x20] sm:$0xff]
  %v1072 = vld [vmem:[%s1066 + $0x28] sm:$0xff]
  %v1073 = vld [vmem:[%s1066 + $0x30] sm:$0xff]
  %v1074 = vld [vmem:[%s1066 + $0x38] sm:$0xff]
  %v1075 = vld [vmem:[%s1066 + $0x40] sm:$0xff]
  %v1076 = vld [vmem:[%s1066 + $0x48] sm:$0xff]
  %v1077 = vld [vmem:[%s1066 + $0x50] sm:$0xff]
  %v1078 = vld [vmem:[%s1066 + $0x58] sm:$0xff]
  %v1079 = vld [vmem:[%s1066 + $0x60] sm:$0xff]
  %v1080 = vld [vmem:[%s1066 + $0x68] sm:$0xff]
  %v1081 = vld [vmem:[%s1066 + $0x70] sm:$0xff]
  %v1082 = vld [vmem:[%s1066 + $0x78] sm:$0xff]
  %v1083 = vld [vmem:[%s14] sm:$0x1]
  %v1084 = vadd.f32 %v1010, %v1011
  %v1085 = vadd.f32 %v1084, %v1012
  %v1086 = vadd.f32 %v1085, %v1013
  %v1087 = vrot.slane %v1086, 4
  %v1088 = vadd.f32 %v1086, %v1087
  %v1089 = vrot.slane %v1088, 2
  %v1090 = vadd.f32 %v1088, %v1089
  %v1091 = vrot.slane %v1090, 1
  %v1092 = vadd.f32 %v1090, %v1091
  %1093 = vmatprep.subr.mxu0 0.0
  %1094 = vmatpush1.msra.mxu0 %v1031
  %1095 = vmatprep.subr.mxu0 0.0
  %1096 = vmatpush1.msra.mxu0 %v1030
  %1097 = vmatprep.subr.mxu0 0.0
  %1098 = vmatpush1.msra.mxu0 %v1029
  %1099 = vmatprep.subr.mxu0 0.0
  %1100 = vmatpush1.msra.mxu0 %v1028
  %1101 = vmatprep.subr.mxu0 0.0
  %1102 = vmatpush1.msra.mxu0 %v1027
  %1103 = vmatprep.subr.mxu0 0.0
  %1104 = vmatpush1.msra.mxu0 %v1026
  %1105 = vmatprep.subr.mxu0 0.0
  %1106 = vmatpush1.msra.mxu0 %v1025
  %1107 = vmatprep.subr.mxu0 0.0
  %1108 = vmatpush1.msra.mxu0 %v1024
  %1109 = vmatprep.subr.mxu0 0.0
  %1110 = vmatpush1.msra.mxu0 %v1023
  %1111 = vmatprep.subr.mxu0 0.0
  %1112 = vmatpush1.msra.mxu0 %v1022
  %1113 = vmatprep.subr.mxu0 0.0
  %1114 = vmatpush1.msra.mxu0 %v1021
  %1115 = vmatprep.subr.mxu0 0.0
  %1116 = vmatpush1.msra.mxu0 %v1020
  %1117 = vmatprep.subr.mxu0 0.0
  %1118 = vmatpush1.msra.mxu0 %v1019
  %1119 = vmatprep.subr.mxu0 0.0
  %1120 = vmatpush1.msra.mxu0 %v1018
  %1121 = vmatprep.subr.mxu0 0.0
  %1122 = vmatpush1.msra.mxu0 %v1017
  %1123 = vmatprep.subr.mxu0 0.0
  %1124 = vmatpush1.msra.mxu0 %v1016
  %1125 = vmatprep.subr.mxu0 0.0
  %1126 = vmatpush2.msra.mxu0 0.0
  %1127 = vmatprep.subr.mxu0 0.0
  %1128 = vmatpush2.msra.mxu0 0.0
  %1129 = vmatprep.subr.mxu0 0.0
  %1130 = vmatpush2.msra.mxu0 0.0
  %1131 = vmatprep.subr.mxu0 0.0
  %1132 = vmatpush2.msra.mxu0 0.0
  %1133 = vmatprep.subr.mxu0 0.0
  %1134 = vmatpush2.msra.mxu0 0.0
  %1135 = vmatprep.subr.mxu0 0.0
  %1136 = vmatpush2.msra.mxu0 0.0
  %1137 = vmatprep.subr.mxu0 0.0
  %1138 = vmatpush2.msra.mxu0 0.0
  %1139 = vmatprep.subr.mxu0 0.0
  %1140 = vmatpush2.msra.mxu0 0.0
  %1141 = vmatprep.subr.mxu0 0.0
  %1142 = vmatpush2.msra.mxu0 0.0
  %1143 = vmatprep.subr.mxu0 0.0
  %1144 = vmatpush2.msra.mxu0 0.0
  %1145 = vmatprep.subr.mxu0 0.0
  %1146 = vmatpush2.msra.mxu0 0.0
  %1147 = vmatprep.subr.mxu0 0.0
  %1148 = vmatpush2.msra.mxu0 0.0
  %1149 = vmatprep.subr.mxu0 0.0
  %1150 = vmatpush2.msra.mxu0 0.0
  %1151 = vmatprep.subr.mxu0 0.0
  %1152 = vmatpush2.msra.mxu0 0.0
  %1153 = vmatprep.subr.mxu0 0.0
  %1154 = vmatpush2.msra.mxu0 0.0
  %1155 = vmatprep.subr.mxu0 0.0
  %1156 = vmatpush2.msra.mxu0 0.0
  %1157 = vmatprep.mubr.f32.mxu0 0.0
  %1158 = vmatmul.mubr.f32.gmra.mxu0 %v1092
  %v1159 = vpop.f32.mrf.mxu0
  %v1160 = vadd.f32 0.0, %v1159
  %v1161 = vpop.f32.mrf.mxu0
  %1162 = vdwg.mxu0
  %v1163 = vmul.f32 %v1160, 0.001953125
  %vm1164 = vcmask 64512
  %v1166 = vsel %vm1164, %v1163, 0
  %1168 = vmatprep.subr.mxu0 0.0
  %1169 = vmatpush1.msra.mxu0 0.0
  %1170 = vmatprep.subr.mxu0 0.0
  %1171 = vmatpush1.msra.mxu0 0.0
  %1172 = vmatprep.subr.mxu0 0.0
  %1173 = vmatpush1.msra.mxu0 0.0
  %1174 = vmatprep.subr.mxu0 0.0
  %1175 = vmatpush1.msra.mxu0 0.0
  %1176 = vmatprep.subr.mxu0 0.0
  %1177 = vmatpush1.msra.mxu0 0.0
  %1178 = vmatprep.subr.mxu0 0.0
  %1179 = vmatpush1.msra.mxu0 0.0
  %1180 = vmatprep.subr.mxu0 0.0
  %1181 = vmatpush1.msra.mxu0 0.0
  %1182 = vmatprep.subr.mxu0 0.0
  %1183 = vmatpush1.msra.mxu0 0.0
  %1184 = vmatprep.subr.mxu0 0.0
  %1185 = vmatpush1.msra.mxu0 0.0
  %1186 = vmatprep.subr.mxu0 0.0
  %1187 = vmatpush1.msra.mxu0 0.0
  %1188 = vmatprep.subr.mxu0 0.0
  %1189 = vmatpush1.msra.mxu0 0.0
  %1190 = vmatprep.subr.mxu0 0.0
  %1191 = vmatpush1.msra.mxu0 0.0
  %1192 = vmatprep.subr.mxu0 0.0
  %1193 = vmatpush1.msra.mxu0 0.0
  %1194 = vmatprep.subr.mxu0 0.0
  %1195 = vmatpush1.msra.mxu0 0.0
  %1196 = vmatprep.subr.mxu0 0.0
  %1197 = vmatpush1.msra.mxu0 0.0
  %1198 = vmatprep.subr.mxu0 0.0
  %1199 = vmatpush1.msra.mxu0 %v1032
  %1200 = vmatprep.subr.mxu0 0.0
  %1201 = vmatpush2.msra.mxu0 0.0
  %1202 = vmatprep.subr.mxu0 0.0
  %1203 = vmatpush2.msra.mxu0 0.0
  %1204 = vmatprep.subr.mxu0 0.0
  %1205 = vmatpush2.msra.mxu0 0.0
  %1206 = vmatprep.subr.mxu0 0.0
  %1207 = vmatpush2.msra.mxu0 0.0
  %1208 = vmatprep.subr.mxu0 0.0
  %1209 = vmatpush2.msra.mxu0 0.0
  %1210 = vmatprep.subr.mxu0 0.0
  %1211 = vmatpush2.msra.mxu0 0.0
  %1212 = vmatprep.subr.mxu0 0.0
  %1213 = vmatpush2.msra.mxu0 0.0
  %1214 = vmatprep.subr.mxu0 0.0
  %1215 = vmatpush2.msra.mxu0 0.0
  %1216 = vmatprep.subr.mxu0 0.0
  %1217 = vmatpush2.msra.mxu0 0.0
  %1218 = vmatprep.subr.mxu0 0.0
  %1219 = vmatpush2.msra.mxu0 0.0
  %1220 = vmatprep.subr.mxu0 0.0
  %1221 = vmatpush2.msra.mxu0 0.0
  %1222 = vmatprep.subr.mxu0 0.0
  %1223 = vmatpush2.msra.mxu0 0.0
  %1224 = vmatprep.subr.mxu0 0.0
  %1225 = vmatpush2.msra.mxu0 0.0
  %1226 = vmatprep.subr.mxu0 0.0
  %1227 = vmatpush2.msra.mxu0 0.0
  %1228 = vmatprep.subr.mxu0 0.0
  %1229 = vmatpush2.msra.mxu0 0.0
  %1230 = vmatprep.subr.mxu0 0.0
  %1231 = vmatpush2.msra.mxu0 0.0
  %1232 = vmatprep.mubr.f32.mxu0 0.0
  %1233 = vmatmul.mubr.f32.gmra.mxu0 %v1166
  %v1234 = vpop.f32.mrf.mxu0
  %v1235 = vadd.f32 0.0, %v1234
  %v1236 = vpop.f32.mrf.mxu0
  %1237 = vdwg.mxu0
  %v1238 = vlaneseq
  %v1239 = vshrl.u32 %v1238, 7
  %v1240 = vsub.s32 0, %v1239
  %v1241 = vrot.slane %v1235, %v1240
  %v1242 = vsub.f32 %v1010, %v1241
  %v1243 = vsub.f32 %v1011, %v1241
  %v1244 = vsub.f32 %v1012, %v1241
  %v1245 = vsub.f32 %v1013, %v1241
  %v1246 = vmul.f32 %v1242, %v1242
  %v1247 = vmul.f32 %v1243, %v1243
  %v1248 = vmul.f32 %v1244, %v1244
  %v1249 = vmul.f32 %v1245, %v1245
  %v1250 = vadd.f32 %v1246, %v1247
  %v1251 = vadd.f32 %v1250, %v1248
  %v1252 = vadd.f32 %v1251, %v1249
  %v1253 = vrot.slane %v1252, 4
  %v1254 = vadd.f32 %v1252, %v1253
  %v1255 = vrot.slane %v1254, 2
  %v1256 = vadd.f32 %v1254, %v1255
  %v1257 = vrot.slane %v1256, 1
  %v1258 = vadd.f32 %v1256, %v1257
  %1259 = vmatprep.subr.mxu0 0.0
  %1260 = vmatpush1.msra.mxu0 %v1031
  %1261 = vmatprep.subr.mxu0 0.0
  %1262 = vmatpush1.msra.mxu0 %v1030
  %1263 = vmatprep.subr.mxu0 0.0
  %1264 = vmatpush1.msra.mxu0 %v1029
  %1265 = vmatprep.subr.mxu0 0.0
  %1266 = vmatpush1.msra.mxu0 %v1028
  %1267 = vmatprep.subr.mxu0 0.0
  %1268 = vmatpush1.msra.mxu0 %v1027
  %1269 = vmatprep.subr.mxu0 0.0
  %1270 = vmatpush1.msra.mxu0 %v1026
  %1271 = vmatprep.subr.mxu0 0.0
  %1272 = vmatpush1.msra.mxu0 %v1025
  %1273 = vmatprep.subr.mxu0 0.0
  %1274 = vmatpush1.msra.mxu0 %v1024
  %1275 = vmatprep.subr.mxu0 0.0
  %1276 = vmatpush1.msra.mxu0 %v1023
  %1277 = vmatprep.subr.mxu0 0.0
  %1278 = vmatpush1.msra.mxu0 %v1022
  %1279 = vmatprep.subr.mxu0 0.0
  %1280 = vmatpush1.msra.mxu0 %v1021
  %1281 = vmatprep.subr.mxu0 0.0
  %1282 = vmatpush1.msra.mxu0 %v1020
  %1283 = vmatprep.subr.mxu0 0.0
  %1284 = vmatpush1.msra.mxu0 %v1019
  %1285 = vmatprep.subr.mxu0 0.0
  %1286 = vmatpush1.msra.mxu0 %v1018
  %1287 = vmatprep.subr.mxu0 0.0
  %1288 = vmatpush1.msra.mxu0 %v1017
  %1289 = vmatprep.subr.mxu0 0.0
  %1290 = vmatpush1.msra.mxu0 %v1016
  %1291 = vmatprep.subr.mxu0 0.0
  %1292 = vmatpush2.msra.mxu0 0.0
  %1293 = vmatprep.subr.mxu0 0.0
  %1294 = vmatpush2.msra.mxu0 0.0
  %1295 = vmatprep.subr.mxu0 0.0
  %1296 = vmatpush2.msra.mxu0 0.0
  %1297 = vmatprep.subr.mxu0 0.0
  %1298 = vmatpush2.msra.mxu0 0.0
  %1299 = vmatprep.subr.mxu0 0.0
  %1300 = vmatpush2.msra.mxu0 0.0
  %1301 = vmatprep.subr.mxu0 0.0
  %1302 = vmatpush2.msra.mxu0 0.0
  %1303 = vmatprep.subr.mxu0 0.0
  %1304 = vmatpush2.msra.mxu0 0.0
  %1305 = vmatprep.subr.mxu0 0.0
  %1306 = vmatpush2.msra.mxu0 0.0
  %1307 = vmatprep.subr.mxu0 0.0
  %1308 = vmatpush2.msra.mxu0 0.0
  %1309 = vmatprep.subr.mxu0 0.0
  %1310 = vmatpush2.msra.mxu0 0.0
  %1311 = vmatprep.subr.mxu0 0.0
  %1312 = vmatpush2.msra.mxu0 0.0
  %1313 = vmatprep.subr.mxu0 0.0
  %1314 = vmatpush2.msra.mxu0 0.0
  %1315 = vmatprep.subr.mxu0 0.0
  %1316 = vmatpush2.msra.mxu0 0.0
  %1317 = vmatprep.subr.mxu0 0.0
  %1318 = vmatpush2.msra.mxu0 0.0
  %1319 = vmatprep.subr.mxu0 0.0
  %1320 = vmatpush2.msra.mxu0 0.0
  %1321 = vmatprep.subr.mxu0 0.0
  %1322 = vmatpush2.msra.mxu0 0.0
  %1323 = vmatprep.mubr.f32.mxu0 0.0
  %1324 = vmatmul.mubr.f32.gmra.mxu0 %v1258
  %v1325 = vpop.f32.mrf.mxu0
  %v1326 = vadd.f32 0.0, %v1325
  %v1327 = vpop.f32.mrf.mxu0
  %1328 = vdwg.mxu0
  %v1329 = vmul.f32 %v1326, 0.001953125
  %v1330 = vadd.f32 %v1329, 1e-05
  %v1331 = vrsqrt.pop %v1330
  %v1332 = vmul.f32 %v1014, %v1331
  %v1334 = vsel %vm1164, %v1332, 0
  %1336 = vmatprep.subr.mxu0 0.0
  %1337 = vmatpush1.msra.mxu0 0.0
  %1338 = vmatprep.subr.mxu0 0.0
  %1339 = vmatpush1.msra.mxu0 0.0
  %1340 = vmatprep.subr.mxu0 0.0
  %1341 = vmatpush1.msra.mxu0 0.0
  %1342 = vmatprep.subr.mxu0 0.0
  %1343 = vmatpush1.msra.mxu0 0.0
  %1344 = vmatprep.subr.mxu0 0.0
  %1345 = vmatpush1.msra.mxu0 0.0
  %1346 = vmatprep.subr.mxu0 0.0
  %1347 = vmatpush1.msra.mxu0 0.0
  %1348 = vmatprep.subr.mxu0 0.0
  %1349 = vmatpush1.msra.mxu0 0.0
  %1350 = vmatprep.subr.mxu0 0.0
  %1351 = vmatpush1.msra.mxu0 0.0
  %1352 = vmatprep.subr.mxu0 0.0
  %1353 = vmatpush1.msra.mxu0 0.0
  %1354 = vmatprep.subr.mxu0 0.0
  %1355 = vmatpush1.msra.mxu0 0.0
  %1356 = vmatprep.subr.mxu0 0.0
  %1357 = vmatpush1.msra.mxu0 0.0
  %1358 = vmatprep.subr.mxu0 0.0
  %1359 = vmatpush1.msra.mxu0 0.0
  %1360 = vmatprep.subr.mxu0 0.0
  %1361 = vmatpush1.msra.mxu0 0.0
  %1362 = vmatprep.subr.mxu0 0.0
  %1363 = vmatpush1.msra.mxu0 0.0
  %1364 = vmatprep.subr.mxu0 0.0
  %1365 = vmatpush1.msra.mxu0 0.0
  %1366 = vmatprep.subr.mxu0 0.0
  %1367 = vmatpush1.msra.mxu0 %v1032
  %1368 = vmatprep.subr.mxu0 0.0
  %1369 = vmatpush2.msra.mxu0 0.0
  %1370 = vmatprep.subr.mxu0 0.0
  %1371 = vmatpush2.msra.mxu0 0.0
  %1372 = vmatprep.subr.mxu0 0.0
  %1373 = vmatpush2.msra.mxu0 0.0
  %1374 = vmatprep.subr.mxu0 0.0
  %1375 = vmatpush2.msra.mxu0 0.0
  %1376 = vmatprep.subr.mxu0 0.0
  %1377 = vmatpush2.msra.mxu0 0.0
  %1378 = vmatprep.subr.mxu0 0.0
  %1379 = vmatpush2.msra.mxu0 0.0
  %1380 = vmatprep.subr.mxu0 0.0
  %1381 = vmatpush2.msra.mxu0 0.0
  %1382 = vmatprep.subr.mxu0 0.0
  %1383 = vmatpush2.msra.mxu0 0.0
  %1384 = vmatprep.subr.mxu0 0.0
  %1385 = vmatpush2.msra.mxu0 0.0
  %1386 = vmatprep.subr.mxu0 0.0
  %1387 = vmatpush2.msra.mxu0 0.0
  %1388 = vmatprep.subr.mxu0 0.0
  %1389 = vmatpush2.msra.mxu0 0.0
  %1390 = vmatprep.subr.mxu0 0.0
  %1391 = vmatpush2.msra.mxu0 0.0
  %1392 = vmatprep.subr.mxu0 0.0
  %1393 = vmatpush2.msra.mxu0 0.0
  %1394 = vmatprep.subr.mxu0 0.0
  %1395 = vmatpush2.msra.mxu0 0.0
  %1396 = vmatprep.subr.mxu0 0.0
  %1397 = vmatpush2.msra.mxu0 0.0
  %1398 = vmatprep.subr.mxu0 0.0
  %1399 = vmatpush2.msra.mxu0 0.0
  %1400 = vmatprep.mubr.f32.mxu0 0.0
  %1401 = vmatmul.mubr.f32.gmra.mxu0 %v1334
  %v1402 = vpop.f32.mrf.mxu0
  %v1403 = vadd.f32 0.0, %v1402
  %v1404 = vpop.f32.mrf.mxu0
  %1405 = vdwg.mxu0
  %v1407 = vsel %vm1164, %v1015, 0
  %1409 = vmatprep.subr.mxu0 0.0
  %1410 = vmatpush1.msra.mxu0 0.0
  %1411 = vmatprep.subr.mxu0 0.0
  %1412 = vmatpush1.msra.mxu0 0.0
  %1413 = vmatprep.subr.mxu0 0.0
  %1414 = vmatpush1.msra.mxu0 0.0
  %1415 = vmatprep.subr.mxu0 0.0
  %1416 = vmatpush1.msra.mxu0 0.0
  %1417 = vmatprep.subr.mxu0 0.0
  %1418 = vmatpush1.msra.mxu0 0.0
  %1419 = vmatprep.subr.mxu0 0.0
  %1420 = vmatpush1.msra.mxu0 0.0
  %1421 = vmatprep.subr.mxu0 0.0
  %1422 = vmatpush1.msra.mxu0 0.0
  %1423 = vmatprep.subr.mxu0 0.0
  %1424 = vmatpush1.msra.mxu0 0.0
  %1425 = vmatprep.subr.mxu0 0.0
  %1426 = vmatpush1.msra.mxu0 0.0
  %1427 = vmatprep.subr.mxu0 0.0
  %1428 = vmatpush1.msra.mxu0 0.0
  %1429 = vmatprep.subr.mxu0 0.0
  %1430 = vmatpush1.msra.mxu0 0.0
  %1431 = vmatprep.subr.mxu0 0.0
  %1432 = vmatpush1.msra.mxu0 0.0
  %1433 = vmatprep.subr.mxu0 0.0
  %1434 = vmatpush1.msra.mxu0 0.0
  %1435 = vmatprep.subr.mxu0 0.0
  %1436 = vmatpush1.msra.mxu0 0.0
  %1437 = vmatprep.subr.mxu0 0.0
  %1438 = vmatpush1.msra.mxu0 0.0
  %1439 = vmatprep.subr.mxu0 0.0
  %1440 = vmatpush1.msra.mxu0 %v1032
  %1441 = vmatprep.subr.mxu0 0.0
  %1442 = vmatpush2.msra.mxu0 0.0
  %1443 = vmatprep.subr.mxu0 0.0
  %1444 = vmatpush2.msra.mxu0 0.0
  %1445 = vmatprep.subr.mxu0 0.0
  %1446 = vmatpush2.msra.mxu0 0.0
  %1447 = vmatprep.subr.mxu0 0.0
  %1448 = vmatpush2.msra.mxu0 0.0
  %1449 = vmatprep.subr.mxu0 0.0
  %1450 = vmatpush2.msra.mxu0 0.0
  %1451 = vmatprep.subr.mxu0 0.0
  %1452 = vmatpush2.msra.mxu0 0.0
  %1453 = vmatprep.subr.mxu0 0.0
  %1454 = vmatpush2.msra.mxu0 0.0
  %1455 = vmatprep.subr.mxu0 0.0
  %1456 = vmatpush2.msra.mxu0 0.0
  %1457 = vmatprep.subr.mxu0 0.0
  %1458 = vmatpush2.msra.mxu0 0.0
  %1459 = vmatprep.subr.mxu0 0.0
  %1460 = vmatpush2.msra.mxu0 0.0
  %1461 = vmatprep.subr.mxu0 0.0
  %1462 = vmatpush2.msra.mxu0 0.0
  %1463 = vmatprep.subr.mxu0 0.0
  %1464 = vmatpush2.msra.mxu0 0.0
  %1465 = vmatprep.subr.mxu0 0.0
  %1466 = vmatpush2.msra.mxu0 0.0
  %1467 = vmatprep.subr.mxu0 0.0
  %1468 = vmatpush2.msra.mxu0 0.0
  %1469 = vmatprep.subr.mxu0 0.0
  %1470 = vmatpush2.msra.mxu0 0.0
  %1471 = vmatprep.subr.mxu0 0.0
  %1472 = vmatpush2.msra.mxu0 0.0
  %1473 = vmatprep.mubr.f32.mxu0 0.0
  %1474 = vmatmul.mubr.f32.gmra.mxu0 %v1407
  %v1475 = vpop.f32.mrf.mxu0
  %v1476 = vadd.f32 0.0, %v1475
  %v1477 = vpop.f32.mrf.mxu0
  %1478 = vdwg.mxu0
  %v1479 = vlaneseq
  %v1480 = vshrl.u32 %v1479, 7
  %v1481 = vsub.s32 0, %v1480
  %v1482 = vrot.slane %v1403, %v1481
  %v1483 = vmul.f32 %v1242, %v1482
  %v1484 = vmul.f32 %v1243, %v1482
  %v1485 = vmul.f32 %v1244, %v1482
  %v1486 = vmul.f32 %v1245, %v1482
  %v1487 = vlaneseq
  %v1488 = vshrl.u32 %v1487, 7
  %v1489 = vsub.s32 0, %v1488
  %v1490 = vrot.slane %v1476, %v1489
  %v1491 = vadd.f32 %v1483, %v1490
  %v1492 = vadd.f32 %v1484, %v1490
  %v1493 = vadd.f32 %v1485, %v1490
  %v1494 = vadd.f32 %v1486, %v1490
  %v1495 = vmax.f32 %v1491, 0.0
  %v1496 = vmax.f32 %v1492, 0.0
  %v1497 = vmax.f32 %v1493, 0.0
  %v1498 = vmax.f32 %v1494, 0.0
  %1499 = vmatprep.subr.mxu0 0.0
  %1500 = vmatpush1.msra.mxu0 %v1048
  %1501 = vmatprep.subr.mxu0 0.0
  %1502 = vmatpush1.msra.mxu0 %v1047
  %1503 = vmatprep.subr.mxu0 0.0
  %1504 = vmatpush1.msra.mxu0 %v1046
  %1505 = vmatprep.subr.mxu0 0.0
  %1506 = vmatpush1.msra.mxu0 %v1045
  %1507 = vmatprep.subr.mxu0 0.0
  %1508 = vmatpush1.msra.mxu0 %v1044
  %1509 = vmatprep.subr.mxu0 0.0
  %1510 = vmatpush1.msra.mxu0 %v1043
  %1511 = vmatprep.subr.mxu0 0.0
  %1512 = vmatpush1.msra.mxu0 %v1042
  %1513 = vmatprep.subr.mxu0 0.0
  %1514 = vmatpush1.msra.mxu0 %v1041
  %1515 = vmatprep.subr.mxu0 0.0
  %1516 = vmatpush1.msra.mxu0 %v1040
  %1517 = vmatprep.subr.mxu0 0.0
  %1518 = vmatpush1.msra.mxu0 %v1039
  %1519 = vmatprep.subr.mxu0 0.0
  %1520 = vmatpush1.msra.mxu0 %v1038
  %1521 = vmatprep.subr.mxu0 0.0
  %1522 = vmatpush1.msra.mxu0 %v1037
  %1523 = vmatprep.subr.mxu0 0.0
  %1524 = vmatpush1.msra.mxu0 %v1036
  %1525 = vmatprep.subr.mxu0 0.0
  %1526 = vmatpush1.msra.mxu0 %v1035
  %1527 = vmatprep.subr.mxu0 0.0
  %1528 = vmatpush1.msra.mxu0 %v1034
  %1529 = vmatprep.subr.mxu0 0.0
  %1530 = vmatpush1.msra.mxu0 %v1033
  %1531 = vmatprep.subr.mxu0 0.0
  %1532 = vmatpush2.msra.mxu0 0.0
  %1533 = vmatprep.subr.mxu0 0.0
  %1534 = vmatpush2.msra.mxu0 0.0
  %1535 = vmatprep.subr.mxu0 0.0
  %1536 = vmatpush2.msra.mxu0 0.0
  %1537 = vmatprep.subr.mxu0 0.0
  %1538 = vmatpush2.msra.mxu0 0.0
  %1539 = vmatprep.subr.mxu0 0.0
  %1540 = vmatpush2.msra.mxu0 0.0
  %1541 = vmatprep.subr.mxu0 0.0
  %1542 = vmatpush2.msra.mxu0 0.0
  %1543 = vmatprep.subr.mxu0 0.0
  %1544 = vmatpush2.msra.mxu0 0.0
  %1545 = vmatprep.subr.mxu0 0.0
  %1546 = vmatpush2.msra.mxu0 0.0
  %1547 = vmatprep.subr.mxu0 0.0
  %1548 = vmatpush2.msra.mxu0 0.0
  %1549 = vmatprep.subr.mxu0 0.0
  %1550 = vmatpush2.msra.mxu0 0.0
  %1551 = vmatprep.subr.mxu0 0.0
  %1552 = vmatpush2.msra.mxu0 0.0
  %1553 = vmatprep.subr.mxu0 0.0
  %1554 = vmatpush2.msra.mxu0 0.0
  %1555 = vmatprep.subr.mxu0 0.0
  %1556 = vmatpush2.msra.mxu0 0.0
  %1557 = vmatprep.subr.mxu0 0.0
  %1558 = vmatpush2.msra.mxu0 0.0
  %1559 = vmatprep.subr.mxu0 0.0
  %1560 = vmatpush2.msra.mxu0 0.0
  %1561 = vmatprep.subr.mxu0 0.0
  %1562 = vmatpush2.msra.mxu0 0.0
  %1563 = vmatprep.mubr.f32.mxu0 0.0
  %1564 = vmatmul.mubr.f32.gmra.mxu0 %v1495
  %v1565 = vpop.f32.mrf.mxu0
  %v1566 = vadd.f32 0.0, %v1565
  %v1567 = vpop.f32.mrf.mxu0
  %1568 = vmatprep.mubr.f32.mxu0 0.0
  %1569 = vmatmul.mubr.f32.gmra.mxu0 %v1496
  %v1570 = vpop.f32.mrf.mxu0
  %v1571 = vadd.f32 0.0, %v1570
  %v1572 = vpop.f32.mrf.mxu0
  %1573 = vmatprep.mubr.f32.mxu0 0.0
  %1574 = vmatmul.mubr.f32.gmra.mxu0 %v1497
  %v1575 = vpop.f32.mrf.mxu0
  %v1576 = vadd.f32 0.0, %v1575
  %v1577 = vpop.f32.mrf.mxu0
  %1578 = vmatprep.mubr.f32.mxu0 0.0
  %1579 = vmatmul.mubr.f32.gmra.mxu0 %v1498
  %v1580 = vpop.f32.mrf.mxu0
  %v1581 = vadd.f32 0.0, %v1580
  %v1582 = vpop.f32.mrf.mxu0
  %1583 = vdwg.mxu0
  %1584 = vmatprep.subr.mxu0 0.0
  %1585 = vmatpush1.msra.mxu0 %v1065
  %1586 = vmatprep.subr.mxu0 0.0
  %1587 = vmatpush1.msra.mxu0 %v1064
  %1588 = vmatprep.subr.mxu0 0.0
  %1589 = vmatpush1.msra.mxu0 %v1063
  %1590 = vmatprep.subr.mxu0 0.0
  %1591 = vmatpush1.msra.mxu0 %v1062
  %1592 = vmatprep.subr.mxu0 0.0
  %1593 = vmatpush1.msra.mxu0 %v1061
  %1594 = vmatprep.subr.mxu0 0.0
  %1595 = vmatpush1.msra.mxu0 %v1060
  %1596 = vmatprep.subr.mxu0 0.0
  %1597 = vmatpush1.msra.mxu0 %v1059
  %1598 = vmatprep.subr.mxu0 0.0
  %1599 = vmatpush1.msra.mxu0 %v1058
  %1600 = vmatprep.subr.mxu0 0.0
  %1601 = vmatpush1.msra.mxu0 %v1057
  %1602 = vmatprep.subr.mxu0 0.0
  %1603 = vmatpush1.msra.mxu0 %v1056
  %1604 = vmatprep.subr.mxu0 0.0
  %1605 = vmatpush1.msra.mxu0 %v1055
  %1606 = vmatprep.subr.mxu0 0.0
  %1607 = vmatpush1.msra.mxu0 %v1054
  %1608 = vmatprep.subr.mxu0 0.0
  %1609 = vmatpush1.msra.mxu0 %v1053
  %1610 = vmatprep.subr.mxu0 0.0
  %1611 = vmatpush1.msra.mxu0 %v1052
  %1612 = vmatprep.subr.mxu0 0.0
  %1613 = vmatpush1.msra.mxu0 %v1051
  %1614 = vmatprep.subr.mxu0 0.0
  %1615 = vmatpush1.msra.mxu0 %v1050
  %1616 = vmatprep.subr.mxu0 0.0
  %1617 = vmatpush2.msra.mxu0 0.0
  %1618 = vmatprep.subr.mxu0 0.0
  %1619 = vmatpush2.msra.mxu0 0.0
  %1620 = vmatprep.subr.mxu0 0.0
  %1621 = vmatpush2.msra.mxu0 0.0
  %1622 = vmatprep.subr.mxu0 0.0
  %1623 = vmatpush2.msra.mxu0 0.0
  %1624 = vmatprep.subr.mxu0 0.0
  %1625 = vmatpush2.msra.mxu0 0.0
  %1626 = vmatprep.subr.mxu0 0.0
  %1627 = vmatpush2.msra.mxu0 0.0
  %1628 = vmatprep.subr.mxu0 0.0
  %1629 = vmatpush2.msra.mxu0 0.0
  %1630 = vmatprep.subr.mxu0 0.0
  %1631 = vmatpush2.msra.mxu0 0.0
  %1632 = vmatprep.subr.mxu0 0.0
  %1633 = vmatpush2.msra.mxu0 0.0
  %1634 = vmatprep.subr.mxu0 0.0
  %1635 = vmatpush2.msra.mxu0 0.0
  %1636 = vmatprep.subr.mxu0 0.0
  %1637 = vmatpush2.msra.mxu0 0.0
  %1638 = vmatprep.subr.mxu0 0.0
  %1639 = vmatpush2.msra.mxu0 0.0
  %1640 = vmatprep.subr.mxu0 0.0
  %1641 = vmatpush2.msra.mxu0 0.0
  %1642 = vmatprep.subr.mxu0 0.0
  %1643 = vmatpush2.msra.mxu0 0.0
  %1644 = vmatprep.subr.mxu0 0.0
  %1645 = vmatpush2.msra.mxu0 0.0
  %1646 = vmatprep.subr.mxu0 0.0
  %1647 = vmatpush2.msra.mxu0 0.0
  %1648 = vmatprep.mubr.f32.mxu0 0.0
  %1649 = vmatmul.mubr.f32.gmra.mxu0 %v1495
  %v1650 = vpop.f32.mrf.mxu0
  %v1651 = vadd.f32 0.0, %v1650
  %v1652 = vpop.f32.mrf.mxu0
  %1653 = vmatprep.mubr.f32.mxu0 0.0
  %1654 = vmatmul.mubr.f32.gmra.mxu0 %v1496
  %v1655 = vpop.f32.mrf.mxu0
  %v1656 = vadd.f32 0.0, %v1655
  %v1657 = vpop.f32.mrf.mxu0
  %1658 = vmatprep.mubr.f32.mxu0 0.0
  %1659 = vmatmul.mubr.f32.gmra.mxu0 %v1497
  %v1660 = vpop.f32.mrf.mxu0
  %v1661 = vadd.f32 0.0, %v1660
  %v1662 = vpop.f32.mrf.mxu0
  %1663 = vmatprep.mubr.f32.mxu0 0.0
  %1664 = vmatmul.mubr.f32.gmra.mxu0 %v1498
  %v1665 = vpop.f32.mrf.mxu0
  %v1666 = vadd.f32 0.0, %v1665
  %v1667 = vpop.f32.mrf.mxu0
  %1668 = vdwg.mxu0
  %1669 = vmatprep.subr.mxu0 0.0
  %1670 = vmatpush1.msra.mxu0 %v1082
  %1671 = vmatprep.subr.mxu0 0.0
  %1672 = vmatpush1.msra.mxu0 %v1081
  %1673 = vmatprep.subr.mxu0 0.0
  %1674 = vmatpush1.msra.mxu0 %v1080
  %1675 = vmatprep.subr.mxu0 0.0
  %1676 = vmatpush1.msra.mxu0 %v1079
  %1677 = vmatprep.subr.mxu0 0.0
  %1678 = vmatpush1.msra.mxu0 %v1078
  %1679 = vmatprep.subr.mxu0 0.0
  %1680 = vmatpush1.msra.mxu0 %v1077
  %1681 = vmatprep.subr.mxu0 0.0
  %1682 = vmatpush1.msra.mxu0 %v1076
  %1683 = vmatprep.subr.mxu0 0.0
  %1684 = vmatpush1.msra.mxu0 %v1075
  %1685 = vmatprep.subr.mxu0 0.0
  %1686 = vmatpush1.msra.mxu0 %v1074
  %1687 = vmatprep.subr.mxu0 0.0
  %1688 = vmatpush1.msra.mxu0 %v1073
  %1689 = vmatprep.subr.mxu0 0.0
  %1690 = vmatpush1.msra.mxu0 %v1072
  %1691 = vmatprep.subr.mxu0 0.0
  %1692 = vmatpush1.msra.mxu0 %v1071
  %1693 = vmatprep.subr.mxu0 0.0
  %1694 = vmatpush1.msra.mxu0 %v1070
  %1695 = vmatprep.subr.mxu0 0.0
  %1696 = vmatpush1.msra.mxu0 %v1069
  %1697 = vmatprep.subr.mxu0 0.0
  %1698 = vmatpush1.msra.mxu0 %v1068
  %1699 = vmatprep.subr.mxu0 0.0
  %1700 = vmatpush1.msra.mxu0 %v1067
  %1701 = vmatprep.subr.mxu0 0.0
  %1702 = vmatpush2.msra.mxu0 0.0
  %1703 = vmatprep.subr.mxu0 0.0
  %1704 = vmatpush2.msra.mxu0 0.0
  %1705 = vmatprep.subr.mxu0 0.0
  %1706 = vmatpush2.msra.mxu0 0.0
  %1707 = vmatprep.subr.mxu0 0.0
  %1708 = vmatpush2.msra.mxu0 0.0
  %1709 = vmatprep.subr.mxu0 0.0
  %1710 = vmatpush2.msra.mxu0 0.0
  %1711 = vmatprep.subr.mxu0 0.0
  %1712 = vmatpush2.msra.mxu0 0.0
  %1713 = vmatprep.subr.mxu0 0.0
  %1714 = vmatpush2.msra.mxu0 0.0
  %1715 = vmatprep.subr.mxu0 0.0
  %1716 = vmatpush2.msra.mxu0 0.0
  %1717 = vmatprep.subr.mxu0 0.0
  %1718 = vmatpush2.msra.mxu0 0.0
  %1719 = vmatprep.subr.mxu0 0.0
  %1720 = vmatpush2.msra.mxu0 0.0
  %1721 = vmatprep.subr.mxu0 0.0
  %1722 = vmatpush2.msra.mxu0 0.0
  %1723 = vmatprep.subr.mxu0 0.0
  %1724 = vmatpush2.msra.mxu0 0.0
  %1725 = vmatprep.subr.mxu0 0.0
  %1726 = vmatpush2.msra.mxu0 0.0
  %1727 = vmatprep.subr.mxu0 0.0
  %1728 = vmatpush2.msra.mxu0 0.0
  %1729 = vmatprep.subr.mxu0 0.0
  %1730 = vmatpush2.msra.mxu0 0.0
  %1731 = vmatprep.subr.mxu0 0.0
  %1732 = vmatpush2.msra.mxu0 0.0
  %1733 = vmatprep.mubr.f32.mxu0 0.0
  %1734 = vmatmul.mubr.f32.gmra.mxu0 %v1495
  %v1735 = vpop.f32.mrf.mxu0
  %v1736 = vadd.f32 0.0, %v1735
  %v1737 = vpop.f32.mrf.mxu0
  %1738 = vmatprep.mubr.f32.mxu0 0.0
  %1739 = vmatmul.mubr.f32.gmra.mxu0 %v1496
  %v1740 = vpop.f32.mrf.mxu0
  %v1741 = vadd.f32 0.0, %v1740
  %v1742 = vpop.f32.mrf.mxu0
  %1743 = vmatprep.mubr.f32.mxu0 0.0
  %1744 = vmatmul.mubr.f32.gmra.mxu0 %v1497
  %v1745 = vpop.f32.mrf.mxu0
  %v1746 = vadd.f32 0.0, %v1745
  %v1747 = vpop.f32.mrf.mxu0
  %1748 = vmatprep.mubr.f32.mxu0 0.0
  %1749 = vmatmul.mubr.f32.gmra.mxu0 %v1498
  %v1750 = vpop.f32.mrf.mxu0
  %v1751 = vadd.f32 0.0, %v1750
  %v1752 = vpop.f32.mrf.mxu0
  %1753 = vdwg.mxu0
  %v1755 = vlaneseq
  %v1756 = vshrl.u32 %v1755, 7
  %v1757 = vsub.s32 0, %v1756
  %v1758 = vrot.slane %v1083, %v1757
  %v1760 = vadd.f32 %v1758, %v1651
  %v1761 = vadd.f32 %v1758, %v1656
  %v1762 = vadd.f32 %v1758, %v1661
  %v1763 = vadd.f32 %v1758, %v1666
  %1764 = vmatprep.subr.mxu0 0.0
  %1765 = vmatpush1.msra.mxu0 0.0
  %1766 = vmatprep.subr.mxu0 0.0
  %1767 = vmatpush1.msra.mxu0 0.0
  %1768 = vmatprep.subr.mxu0 0.0
  %1769 = vmatpush1.msra.mxu0 0.0
  %1770 = vmatprep.subr.mxu0 0.0
  %1771 = vmatpush1.msra.mxu0 0.0
  %1772 = vmatprep.subr.mxu0 0.0
  %1773 = vmatpush1.msra.mxu0 0.0
  %1774 = vmatprep.subr.mxu0 0.0
  %1775 = vmatpush1.msra.mxu0 0.0
  %1776 = vmatprep.subr.mxu0 0.0
  %1777 = vmatpush1.msra.mxu0 0.0
  %1778 = vmatprep.subr.mxu0 0.0
  %1779 = vmatpush1.msra.mxu0 0.0
  %1780 = vmatprep.subr.mxu0 0.0
  %1781 = vmatpush1.msra.mxu0 0.0
  %1782 = vmatprep.subr.mxu0 0.0
  %1783 = vmatpush1.msra.mxu0 0.0
  %1784 = vmatprep.subr.mxu0 0.0
  %1785 = vmatpush1.msra.mxu0 0.0
  %1786 = vmatprep.subr.mxu0 0.0
  %1787 = vmatpush1.msra.mxu0 0.0
  %1788 = vmatprep.subr.mxu0 0.0
  %1789 = vmatpush1.msra.mxu0 %v1581
  %1790 = vmatprep.subr.mxu0 0.0
  %1791 = vmatpush1.msra.mxu0 %v1576
  %1792 = vmatprep.subr.mxu0 0.0
  %1793 = vmatpush1.msra.mxu0 %v1571
  %1794 = vmatprep.subr.mxu0 0.0
  %1795 = vmatpush1.msra.mxu0 %v1566
  %1796 = vmatprep.subr.mxu0 0.0
  %1797 = vmatpush2.msra.mxu0 0.0
  %1798 = vmatprep.subr.mxu0 0.0
  %1799 = vmatpush2.msra.mxu0 0.0
  %1800 = vmatprep.subr.mxu0 0.0
  %1801 = vmatpush2.msra.mxu0 0.0
  %1802 = vmatprep.subr.mxu0 0.0
  %1803 = vmatpush2.msra.mxu0 0.0
  %1804 = vmatprep.subr.mxu0 0.0
  %1805 = vmatpush2.msra.mxu0 0.0
  %1806 = vmatprep.subr.mxu0 0.0
  %1807 = vmatpush2.msra.mxu0 0.0
  %1808 = vmatprep.subr.mxu0 0.0
  %1809 = vmatpush2.msra.mxu0 0.0
  %1810 = vmatprep.subr.mxu0 0.0
  %1811 = vmatpush2.msra.mxu0 0.0
  %1812 = vmatprep.subr.mxu0 0.0
  %1813 = vmatpush2.msra.mxu0 0.0
  %1814 = vmatprep.subr.mxu0 0.0
  %1815 = vmatpush2.msra.mxu0 0.0
  %1816 = vmatprep.subr.mxu0 0.0
  %1817 = vmatpush2.msra.mxu0 0.0
  %1818 = vmatprep.subr.mxu0 0.0
  %1819 = vmatpush2.msra.mxu0 0.0
  %1820 = vmatprep.subr.mxu0 0.0
  %1821 = vmatpush2.msra.mxu0 0.0
  %1822 = vmatprep.subr.mxu0 0.0
  %1823 = vmatpush2.msra.mxu0 0.0
  %1824 = vmatprep.subr.mxu0 0.0
  %1825 = vmatpush2.msra.mxu0 0.0
  %1826 = vmatprep.subr.mxu0 0.0
  %1827 = vmatpush2.msra.mxu0 0.0
  %1828 = vmatprep.mubr.f32.mxu0 0.0
  %1829 = vmatmul.mubr.f32.gmra.mxu0 %v813
  %v1830 = vpop.f32.mrf.mxu0
  %v1831 = vadd.f32 0.0, %v1830
  %v1832 = vpop.f32.mrf.mxu0
  %1833 = vmatprep.mubr.f32.mxu0 0.0
  %1834 = vmatmul.mubr.f32.gmra.mxu0 %v816
  %v1835 = vpop.f32.mrf.mxu0
  %v1836 = vadd.f32 0.0, %v1835
  %v1837 = vpop.f32.mrf.mxu0
  %1838 = vmatprep.mubr.f32.mxu0 0.0
  %1839 = vmatmul.mubr.f32.gmra.mxu0 %v819
  %v1840 = vpop.f32.mrf.mxu0
  %v1841 = vadd.f32 0.0, %v1840
  %v1842 = vpop.f32.mrf.mxu0
  %1843 = vmatprep.mubr.f32.mxu0 0.0
  %1844 = vmatmul.mubr.f32.gmra.mxu0 %v822
  %v1845 = vpop.f32.mrf.mxu0
  %v1846 = vadd.f32 0.0, %v1845
  %v1847 = vpop.f32.mrf.mxu0
  %1848 = vdwg.mxu0
  %v1849 = vadd.f32 %v1760, %v1831
  %v1850 = vadd.f32 %v1761, %v1836
  %v1851 = vadd.f32 %v1762, %v1841
  %v1852 = vadd.f32 %v1763, %v1846
  %1853 = vmatprep.subr.mxu0 0.0
  %1854 = vmatpush1.msra.mxu0 0.0
  %1855 = vmatprep.subr.mxu0 0.0
  %1856 = vmatpush1.msra.mxu0 0.0
  %1857 = vmatprep.subr.mxu0 0.0
  %1858 = vmatpush1.msra.mxu0 0.0
  %1859 = vmatprep.subr.mxu0 0.0
  %1860 = vmatpush1.msra.mxu0 0.0
  %1861 = vmatprep.subr.mxu0 0.0
  %1862 = vmatpush1.msra.mxu0 0.0
  %1863 = vmatprep.subr.mxu0 0.0
  %1864 = vmatpush1.msra.mxu0 0.0
  %1865 = vmatprep.subr.mxu0 0.0
  %1866 = vmatpush1.msra.mxu0 0.0
  %1867 = vmatprep.subr.mxu0 0.0
  %1868 = vmatpush1.msra.mxu0 0.0
  %1869 = vmatprep.subr.mxu0 0.0
  %1870 = vmatpush1.msra.mxu0 0.0
  %1871 = vmatprep.subr.mxu0 0.0
  %1872 = vmatpush1.msra.mxu0 0.0
  %1873 = vmatprep.subr.mxu0 0.0
  %1874 = vmatpush1.msra.mxu0 0.0
  %1875 = vmatprep.subr.mxu0 0.0
  %1876 = vmatpush1.msra.mxu0 0.0
  %1877 = vmatprep.subr.mxu0 0.0
  %1878 = vmatpush1.msra.mxu0 %v1751
  %1879 = vmatprep.subr.mxu0 0.0
  %1880 = vmatpush1.msra.mxu0 %v1746
  %1881 = vmatprep.subr.mxu0 0.0
  %1882 = vmatpush1.msra.mxu0 %v1741
  %1883 = vmatprep.subr.mxu0 0.0
  %1884 = vmatpush1.msra.mxu0 %v1736
  %1885 = vmatprep.subr.mxu0 0.0
  %1886 = vmatpush2.msra.mxu0 0.0
  %1887 = vmatprep.subr.mxu0 0.0
  %1888 = vmatpush2.msra.mxu0 0.0
  %1889 = vmatprep.subr.mxu0 0.0
  %1890 = vmatpush2.msra.mxu0 0.0
  %1891 = vmatprep.subr.mxu0 0.0
  %1892 = vmatpush2.msra.mxu0 0.0
  %1893 = vmatprep.subr.mxu0 0.0
  %1894 = vmatpush2.msra.mxu0 0.0
  %1895 = vmatprep.subr.mxu0 0.0
  %1896 = vmatpush2.msra.mxu0 0.0
  %1897 = vmatprep.subr.mxu0 0.0
  %1898 = vmatpush2.msra.mxu0 0.0
  %1899 = vmatprep.subr.mxu0 0.0
  %1900 = vmatpush2.msra.mxu0 0.0
  %1901 = vmatprep.subr.mxu0 0.0
  %1902 = vmatpush2.msra.mxu0 0.0
  %1903 = vmatprep.subr.mxu0 0.0
  %1904 = vmatpush2.msra.mxu0 0.0
  %1905 = vmatprep.subr.mxu0 0.0
  %1906 = vmatpush2.msra.mxu0 0.0
  %1907 = vmatprep.subr.mxu0 0.0
  %1908 = vmatpush2.msra.mxu0 0.0
  %1909 = vmatprep.subr.mxu0 0.0
  %1910 = vmatpush2.msra.mxu0 0.0
  %1911 = vmatprep.subr.mxu0 0.0
  %1912 = vmatpush2.msra.mxu0 0.0
  %1913 = vmatprep.subr.mxu0 0.0
  %1914 = vmatpush2.msra.mxu0 0.0
  %1915 = vmatprep.subr.mxu0 0.0
  %1916 = vmatpush2.msra.mxu0 0.0
  %1917 = vmatprep.mubr.f32.mxu0 0.0
  %1918 = vmatmul.mubr.f32.gmra.mxu0 %v914
  %v1919 = vpop.f32.mrf.mxu0
  %v1920 = vadd.f32 0.0, %v1919
  %v1921 = vpop.f32.mrf.mxu0
  %1922 = vmatprep.mubr.f32.mxu0 0.0
  %1923 = vmatmul.mubr.f32.gmra.mxu0 %v917
  %v1924 = vpop.f32.mrf.mxu0
  %v1925 = vadd.f32 0.0, %v1924
  %v1926 = vpop.f32.mrf.mxu0
  %1927 = vmatprep.mubr.f32.mxu0 0.0
  %1928 = vmatmul.mubr.f32.gmra.mxu0 %v920
  %v1929 = vpop.f32.mrf.mxu0
  %v1930 = vadd.f32 0.0, %v1929
  %v1931 = vpop.f32.mrf.mxu0
  %1932 = vmatprep.mubr.f32.mxu0 0.0
  %1933 = vmatmul.mubr.f32.gmra.mxu0 %v923
  %v1934 = vpop.f32.mrf.mxu0
  %v1935 = vadd.f32 0.0, %v1934
  %v1936 = vpop.f32.mrf.mxu0
  %1937 = vdwg.mxu0
  %v1938 = vadd.f32 %v1849, %v1920
  %v1939 = vadd.f32 %v1850, %v1925
  %v1940 = vadd.f32 %v1851, %v1930
  %v1941 = vadd.f32 %v1852, %v1935
  %1942 = vst [vmem:[%s15] sm:$0xff] %v1938
  %1943 = vst [vmem:[%s15 + $0x8] sm:$0xff] %v1939
  %1944 = vst [vmem:[%s15 + $0x10] sm:$0xff] %v1940
  %1945 = vst [vmem:[%s15 + $0x18] sm:$0xff] %v1941
  // Predicated region
  $region62: #{pre_activate_double_conv.1} parent=0 // pred_check
    _
  $region63: #{pre_activate_double_conv.1} parent=0 // pred_check_branch
    %1947 = sbr.rel (0) target = $region65
  $region64: #{pre_activate_double_conv.1} parent=0 // pred_region
    _
  $region65: #{pre_activate_double_conv.1} parent=0 // pred_fallthru
    _
  // Predicated region
  $region66: #{pre_activate_double_conv.1} parent=0 // pred_check
    _
  $region67: #{pre_activate_double_conv.1} parent=0 // pred_check_branch
    %1949 = sbr.rel (0) target = $region69
  $region68: #{pre_activate_double_conv.1} parent=0 // pred_region
    _
  $region69: #{pre_activate_double_conv.1} parent=0 // pred_fallthru
    _

</llo_original>
